<compile_context>
chip_gen: v6e
topology: v6e:2x2x1
jax: 0.10.0
libtpu: 0.0.40
codegen_flags: <defaults>
</compile_context>

<pallas_src>
import functools

import jax
import jax.numpy as jnp
import numpy as np
from jax.experimental import pallas as pl
from jax.experimental.pallas import tpu as pltpu

_FP_PAD = 128  # lane-dense width for the 6-wide frame-parameter output


# ----------------------------------------------------------------------------
# Pallas kernel: one batch element per grid step (batch axis is "parallel").
# ----------------------------------------------------------------------------
def _structure_block_kernel(
    h_ref,
    wqkv_ref, bqkv_ref, wo_ref, bo_ref,
    g1_ref, be1_ref, g2_ref, be2_ref,
    w1_ref, b1_ref, w2_ref, b2_ref,
    wf1_ref, bf1_ref, wf2_ref, bf2_ref,
    h_out_ref, fp_out_ref,
    *, num_heads, head_dim, use_einshape,
):
    eps = 1e-5
    h = h_ref[0]                       # (S, D) f32 residual stream
    csz = 3 * head_dim                 # per-head fused [q|k|v] width

    def layernorm(x, gamma, beta):
        mu = jnp.mean(x, axis=-1, keepdims=True)
        xc = x - mu
        var = jnp.mean(xc * xc, axis=-1, keepdims=True)
        return xc * jax.lax.rsqrt(var + eps) * gamma + beta

    def mm(x_f32, w_ref, b_ref):
        # bf16 MXU operands, f32 accumulation, f32 bias add.
        out = jnp.dot(x_f32.astype(jnp.bfloat16), w_ref[...],
                      preferred_element_type=jnp.float32)
        return out + b_ref[0]

    # --- norm1 + fused, head-interleaved QKV projection ----------------------
    hn = layernorm(h, g1_ref[0], be1_ref[0])
    qkv = mm(hn, wqkv_ref, bqkv_ref)   # (S, 3D): cols = [h0: q|k|v, h1: q|k|v, ...]

    # --- rearrange once to head-major (H, S, 3*head_dim) ---------------------
    if use_einshape:
        qkv_h = pltpu.einshape("s(hc)->hsc", qkv, h=num_heads)
    else:
        qkv_h = jnp.stack(
            [qkv[:, hi * csz:(hi + 1) * csz] for hi in range(num_heads)], axis=0)

    scale = float(head_dim) ** -0.5
    q = qkv_h[:, :, :head_dim] * scale
    k = qkv_h[:, :, head_dim:2 * head_dim]
    v = qkv_h[:, :, 2 * head_dim:]

    # --- head-batched attention (leading batch dim = heads) ------------------
    s = jnp.einsum("hqc,hkc->hqk",
                   q.astype(jnp.bfloat16), k.astype(jnp.bfloat16),
                   preferred_element_type=jnp.float32)          # (H, S, S)
    s = s - jnp.max(s, axis=-1, keepdims=True)
    p = jnp.exp(s)
    p = p * pl.reciprocal(jnp.sum(p, axis=-1, keepdims=True), approx=True)
    o = jnp.einsum("hqk,hkc->hqc",
                   p.astype(jnp.bfloat16), v.astype(jnp.bfloat16),
                   preferred_element_type=jnp.float32)          # (H, S, head_dim)

    if use_einshape:
        attn = pltpu.einshape("hsc->s(hc)", o)                  # (S, D) head-concat order
    else:
        attn = jnp.concatenate([o[hi] for hi in range(num_heads)], axis=-1)

    attn = mm(attn, wo_ref, bo_ref)
    h1 = h + attn

    # --- norm2 + MLP ----------------------------------------------------------
    h2n = layernorm(h1, g2_ref[0], be2_ref[0])
    m = jnp.maximum(mm(h2n, w1_ref, b1_ref), 0.0)
    h2 = h1 + mm(m, w2_ref, b2_ref)
    h_out_ref[0] = h2

    # --- frame-parameter head (lane-dense, zero-padded to 128 columns) -------
    f = jnp.maximum(mm(h2, wf1_ref, bf1_ref), 0.0)
    fp_out_ref[0] = mm(f, wf2_ref, bf2_ref)                     # (S, 128)


# ----------------------------------------------------------------------------
# Wrapper: weight fusion / padding / bf16 cast + pallas_call + frame glue.
# ----------------------------------------------------------------------------
def _prepare_weights(params, num_heads, hidden_dim):
    D = hidden_dim
    hd = D // num_heads
    f32, bf16 = jnp.float32, jnp.bfloat16

    # Fused, head-interleaved QKV: column index = h*3hd + [q(hd)|k(hd)|v(hd)].
    wqkv = jnp.concatenate(
        [params["wq"].reshape(D, num_heads, hd),
         params["wk"].reshape(D, num_heads, hd),
         params["wv"].reshape(D, num_heads, hd)], axis=2).reshape(D, 3 * D)
    bqkv = jnp.concatenate(
        [params["bq"].reshape(num_heads, hd),
         params["bk"].reshape(num_heads, hd),
         params["bv"].reshape(num_heads, hd)], axis=1).reshape(1, 3 * D)

    # Lane-dense padded frame head: (D,6)->(D,128), (1,6)->(1,128).
    wf2 = jnp.zeros((D, _FP_PAD), f32).at[:, :6].set(params["wf2"])
    bf2 = jnp.zeros((1, _FP_PAD), f32).at[:, :6].set(params["bf2"])

    return [
        wqkv.astype(bf16), bqkv.astype(f32),
        params["wo"].astype(bf16), params["bo"].astype(f32),
        params["g1"].astype(f32), params["be1"].astype(f32),
        params["g2"].astype(f32), params["be2"].astype(f32),
        params["w1"].astype(bf16), params["b1"].astype(f32),
        params["w2"].astype(bf16), params["b2"].astype(f32),
        params["wf1"].astype(bf16), params["bf1"].astype(f32),
        wf2.astype(bf16), bf2.astype(f32),
    ]


def _run_kernel(h, weight_args, *, num_heads, use_einshape):
    B, S, D = h.shape
    head_dim = D // num_heads

    def full_spec(shape):
        nd = len(shape)
        return pl.BlockSpec(shape, lambda b, _nd=nd: (0,) * _nd)

    kernel = functools.partial(
        _structure_block_kernel,
        num_heads=num_heads, head_dim=head_dim, use_einshape=use_einshape)

    # Weights use constant index maps (resident across grid steps); for very
    # large D on v7x they could additionally be single-buffered / tiled.
    return pl.pallas_call(
        kernel,
        out_shape=(
            jax.ShapeDtypeStruct((B, S, D), jnp.float32),
            jax.ShapeDtypeStruct((B, S, _FP_PAD), jnp.float32),
        ),
        grid_spec=pltpu.PrefetchScalarGridSpec(
            num_scalar_prefetch=0,
            grid=(B,),
            in_specs=[pl.BlockSpec((1, S, D), lambda b: (b, 0, 0))]
            + [full_spec(w.shape) for w in weight_args],
            out_specs=[
                pl.BlockSpec((1, S, D), lambda b: (b, 0, 0)),
                pl.BlockSpec((1, S, _FP_PAD), lambda b: (b, 0, 0)),
            ],
        ),
        compiler_params=pltpu.CompilerParams(
            dimension_semantics=("parallel",),
            vmem_limit_bytes=48 * 1024 * 1024,
        ),
    )(h, *weight_args)


def structure_block_pallas(h, frames, positions, params, *, num_heads):
    B, S, D = h.shape
    assert D % num_heads == 0, "hidden_dim must be divisible by num_heads"
    weight_args = _prepare_weights(params, num_heads, D)

    # Primary path uses pltpu.einshape for the single head-major relayout;
    # if that lowering is unavailable on this toolchain, fall back to the
    # slice+stack relayout (identical math, guaranteed to lower).
    h_out = fp_full = None
    for use_einshape in (True, False):
        try:
            h_out, fp_full = _run_kernel(
                h, weight_args, num_heads=num_heads, use_einshape=use_einshape)
            jax.block_until_ready((h_out, fp_full))
            break
        except Exception:  # noqa: BLE001 - retry with the safe relayout path
            if not use_einshape:
                raise

    fp = fp_full[..., :6]

    # ----- plain-JAX glue: assemble 4x4 frame update, compose, move positions
    r0, r1, r2 = fp[..., 0], fp[..., 1], fp[..., 2]
    t0, t1, t2 = fp[..., 3], fp[..., 4], fp[..., 5]
    one = jnp.ones_like(r0)
    zero = jnp.zeros_like(r0)
    row0 = jnp.stack([one, r0, r1, t0], axis=-1)
    row1 = jnp.stack([-r0, one, r2, t1], axis=-1)
    row2 = jnp.stack([-r1, -r2, one, t2], axis=-1)
    row3 = jnp.stack([zero, zero, zero, one], axis=-1)
    frames_update = jnp.stack([row0, row1, row2, row3], axis=-2)  # (B,S,4,4)

    frames_out = jnp.einsum("bsij,bsjk->bsik", frames, frames_update)
    pos_homo = jnp.concatenate(
        [positions, jnp.ones(positions.shape[:-1] + (1,), positions.dtype)], axis=-1)
    positions_out = jnp.einsum(
        "bsij,bsj->bsi", frames_update[..., :3, :], pos_homo)
    return h_out, frames_out, positions_out


# ----------------------------------------------------------------------------
# Pure-JAX reference (f32) for the correctness sanity check.
# ----------------------------------------------------------------------------
def structure_block_ref(h, frames, positions, params, *, num_heads):
    B, S, D = h.shape
    hd = D // num_heads
    eps = 1e-5

    def ln(x, g, b):
        mu = jnp.mean(x, -1, keepdims=True)
        xc = x - mu
        var = jnp.mean(xc * xc, -1, keepdims=True)
        return xc * jax.lax.rsqrt(var + eps) * g[0] + b[0]

    hn = ln(h, params["g1"], params["be1"])
    q = hn @ params["wq"] + params["bq"][0]
    k = hn @ params["wk"] + params["bk"][0]
    v = hn @ params["wv"] + params["bv"][0]
    q = q.reshape(B, S, num_heads, hd).transpose(0, 2, 1, 3)
    k = k.reshape(B, S, num_heads, hd).transpose(0, 2, 1, 3)
    v = v.reshape(B, S, num_heads, hd).transpose(0, 2, 1, 3)
    s = jnp.einsum("bhqd,bhkd->bhqk", q, k) * (hd ** -0.5)
    p = jax.nn.softmax(s, axis=-1)
    o = jnp.einsum("bhqk,bhkd->bhqd", p, v).transpose(0, 2, 1, 3).reshape(B, S, D)
    o = o @ params["wo"] + params["bo"][0]
    h1 = h + o
    m = jnp.maximum(ln(h1, params["g2"], params["be2"]) @ params["w1"] + params["b1"][0], 0.0)
    h2 = h1 + (m @ params["w2"] + params["b2"][0])
    f = jnp.maximum(h2 @ params["wf1"] + params["bf1"][0], 0.0)
    fp = f @ params["wf2"] + params["bf2"][0]

    r, t = fp[..., :3], fp[..., 3:]
    rot = jnp.broadcast_to(jnp.eye(3), (B, S, 3, 3))
    rot = rot.at[..., 0, 1].add(r[..., 0]).at[..., 1, 0].add(-r[..., 0])
    rot = rot.at[..., 0, 2].add(r[..., 1]).at[..., 2, 0].add(-r[..., 1])
    rot = rot.at[..., 1, 2].add(r[..., 2]).at[..., 2, 1].add(-r[..., 2])
    fu = jnp.zeros((B, S, 4, 4))
    fu = fu.at[..., :3, :3].set(rot).at[..., :3, 3].set(t).at[..., 3, 3].set(1.0)
    frames_out = jnp.einsum("bsij,bsjk->bsik", frames, fu)
    ph = jnp.concatenate([positions, jnp.ones((B, S, 1))], -1)
    pos_out = jnp.einsum("bsij,bsj->bsi", fu[..., :3, :], ph)
    return h2, frames_out, pos_out


# ----------------------------------------------------------------------------
# Deterministic parameter init + driver.
# ----------------------------------------------------------------------------
def init_params(key, hidden_dim):
    D = hidden_dim
    ks = jax.random.split(key, 10)

    def lin(k, din, dout):
        kw, kb = jax.random.split(k)
        w = jax.random.normal(kw, (din, dout), jnp.float32) * (din ** -0.5)
        b = jax.random.normal(kb, (1, dout), jnp.float32) * 0.02
        return w, b

    p = {}
    p["wq"], p["bq"] = lin(ks[0], D, D)
    p["wk"], p["bk"] = lin(ks[1], D, D)
    p["wv"], p["bv"] = lin(ks[2], D, D)
    p["wo"], p["bo"] = lin(ks[3], D, D)
    p["w1"], p["b1"] = lin(ks[4], D, 4 * D)
    p["w2"], p["b2"] = lin(ks[5], 4 * D, D)
    p["wf1"], p["bf1"] = lin(ks[6], D, D)
    p["wf2"], p["bf2"] = lin(ks[7], D, 6)
    p["g1"] = jnp.ones((1, D), jnp.float32)
    p["be1"] = jnp.zeros((1, D), jnp.float32)
    p["g2"] = jnp.ones((1, D), jnp.float32)
    p["be2"] = jnp.zeros((1, D), jnp.float32)
    return p


if __name__ == "__main__":
    B, S, D, H = 2, 8, 32, 4

    key = jax.random.PRNGKey(0)
    k_h, k_f, k_p, k_w = jax.random.split(key, 4)

    h = jax.random.normal(k_h, (B, S, D), jnp.float32)
    frames = jnp.broadcast_to(jnp.eye(4, dtype=jnp.float32), (B, S, 4, 4)) \
        + 0.01 * jax.random.normal(k_f, (B, S, 4, 4), jnp.float32)
    positions = jax.random.normal(k_p, (B, S, 3), jnp.float32)

    params = init_params(k_w, D)

    h_out, frames_out, pos_out = structure_block_pallas(
        h, frames, positions, params, num_heads=H)
    jax.block_until_ready((h_out, frames_out, pos_out))

    # Correctness sanity check vs. f32 reference (bf16 MXU operands -> looser tol).
    h_r, f_r, p_r = structure_block_ref(h, frames, positions, params, num_heads=H)
    np.testing.assert_allclose(np.asarray(h_out), np.asarray(h_r), rtol=5e-2, atol=5e-2)
    np.testing.assert_allclose(np.asarray(frames_out), np.asarray(f_r), rtol=5e-2, atol=5e-2)
    np.testing.assert_allclose(np.asarray(pos_out), np.asarray(p_r), rtol=5e-2, atol=5e-2)

    print("KERNEL_OK")
</pallas_src>

<mosaic_0001>
module attributes {stable_mosaic.version = 11 : i64} {
  func.func @_structure_block_kernel(%arg0: i32, %arg1: memref<1x8x32xf32, #tpu.memory_space<vmem>>, %arg2: memref<32x96xbf16, #tpu.memory_space<vmem>>, %arg3: memref<1x96xf32, #tpu.memory_space<vmem>>, %arg4: memref<32x32xbf16, #tpu.memory_space<vmem>>, %arg5: memref<1x32xf32, #tpu.memory_space<vmem>>, %arg6: memref<1x32xf32, #tpu.memory_space<vmem>>, %arg7: memref<1x32xf32, #tpu.memory_space<vmem>>, %arg8: memref<1x32xf32, #tpu.memory_space<vmem>>, %arg9: memref<1x32xf32, #tpu.memory_space<vmem>>, %arg10: memref<32x128xbf16, #tpu.memory_space<vmem>>, %arg11: memref<1x128xf32, #tpu.memory_space<vmem>>, %arg12: memref<128x32xbf16, #tpu.memory_space<vmem>>, %arg13: memref<1x32xf32, #tpu.memory_space<vmem>>, %arg14: memref<32x32xbf16, #tpu.memory_space<vmem>>, %arg15: memref<1x32xf32, #tpu.memory_space<vmem>>, %arg16: memref<32x128xbf16, #tpu.memory_space<vmem>>, %arg17: memref<1x128xf32, #tpu.memory_space<vmem>>, %arg18: memref<1x8x32xf32, #tpu.memory_space<vmem>>, %arg19: memref<1x8x128xf32, #tpu.memory_space<vmem>>) attributes {dimension_semantics = [#tpu.dimension_semantics<parallel>], iteration_bounds = array<i64: 2>, scalar_prefetch = 0 : i64, scratch_operands = 0 : i64, tpu.core_type = #tpu.core_type<tc>, window_params = [{transform_indices = @transform_0, window_bounds = array<i64: 1, 8, 32>}, {pipeline_mode = #tpu.pipeline_mode<synchronous>, transform_indices = @transform_1, window_bounds = array<i64: 32, 96>}, {pipeline_mode = #tpu.pipeline_mode<synchronous>, transform_indices = @transform_2, window_bounds = array<i64: 1, 96>}, {pipeline_mode = #tpu.pipeline_mode<synchronous>, transform_indices = @transform_3, window_bounds = array<i64: 32, 32>}, {pipeline_mode = #tpu.pipeline_mode<synchronous>, transform_indices = @transform_4, window_bounds = array<i64: 1, 32>}, {pipeline_mode = #tpu.pipeline_mode<synchronous>, transform_indices = @transform_5, window_bounds = array<i64: 1, 32>}, {pipeline_mode = #tpu.pipeline_mode<synchronous>, transform_indices = @transform_6, window_bounds = array<i64: 1, 32>}, {pipeline_mode = #tpu.pipeline_mode<synchronous>, transform_indices = @transform_7, window_bounds = array<i64: 1, 32>}, {pipeline_mode = #tpu.pipeline_mode<synchronous>, transform_indices = @transform_8, window_bounds = array<i64: 1, 32>}, {pipeline_mode = #tpu.pipeline_mode<synchronous>, transform_indices = @transform_9, window_bounds = array<i64: 32, 128>}, {pipeline_mode = #tpu.pipeline_mode<synchronous>, transform_indices = @transform_10, window_bounds = array<i64: 1, 128>}, {pipeline_mode = #tpu.pipeline_mode<synchronous>, transform_indices = @transform_11, window_bounds = array<i64: 128, 32>}, {pipeline_mode = #tpu.pipeline_mode<synchronous>, transform_indices = @transform_12, window_bounds = array<i64: 1, 32>}, {pipeline_mode = #tpu.pipeline_mode<synchronous>, transform_indices = @transform_13, window_bounds = array<i64: 32, 32>}, {pipeline_mode = #tpu.pipeline_mode<synchronous>, transform_indices = @transform_14, window_bounds = array<i64: 1, 32>}, {pipeline_mode = #tpu.pipeline_mode<synchronous>, transform_indices = @transform_15, window_bounds = array<i64: 32, 128>}, {pipeline_mode = #tpu.pipeline_mode<synchronous>, transform_indices = @transform_16, window_bounds = array<i64: 1, 128>}, {transform_indices = @transform_17, window_bounds = array<i64: 1, 8, 32>}, {transform_indices = @transform_18, window_bounds = array<i64: 1, 8, 128>}]} {
    %c0 = arith.constant 0 : index
    %c0_0 = arith.constant 0 : index
    %c0_1 = arith.constant 0 : index
    %0 = vector.load %arg1[%c0, %c0_0, %c0_1] : memref<1x8x32xf32, #tpu.memory_space<vmem>>, vector<1x8x32xf32>
    %1 = vector.shape_cast %0 : vector<1x8x32xf32> to vector<8x32xf32>
    %c0_2 = arith.constant 0 : index
    %c0_3 = arith.constant 0 : index
    %2 = vector.load %arg6[%c0_2, %c0_3] : memref<1x32xf32, #tpu.memory_space<vmem>>, vector<1x32xf32>
    %3 = vector.shape_cast %2 : vector<1x32xf32> to vector<32xf32>
    %c0_4 = arith.constant 0 : index
    %c0_5 = arith.constant 0 : index
    %4 = vector.load %arg7[%c0_4, %c0_5] : memref<1x32xf32, #tpu.memory_space<vmem>>, vector<1x32xf32>
    %5 = vector.shape_cast %4 : vector<1x32xf32> to vector<32xf32>
    %cst = arith.constant dense<0.000000e+00> : vector<8xf32>
    %6 = vector.multi_reduction <add>, %1, %cst [1] : vector<8x32xf32> to vector<8xf32>
    %7 = vector.shape_cast %6 : vector<8xf32> to vector<8x1xf32>
    %cst_6 = arith.constant 3.200000e+01 : f32
    %8 = vector.broadcast %cst_6 : f32 to vector<8x1xf32>
    %9 = arith.divf %7, %8 : vector<8x1xf32>
    %10 = vector.broadcast %9 : vector<8x1xf32> to vector<8x32xf32>
    %11 = arith.subf %1, %10 : vector<8x32xf32>
    %12 = arith.mulf %11, %11 : vector<8x32xf32>
    %cst_7 = arith.constant dense<0.000000e+00> : vector<8xf32>
    %13 = vector.multi_reduction <add>, %12, %cst_7 [1] : vector<8x32xf32> to vector<8xf32>
    %14 = vector.shape_cast %13 : vector<8xf32> to vector<8x1xf32>
    %cst_8 = arith.constant 3.200000e+01 : f32
    %15 = vector.broadcast %cst_8 : f32 to vector<8x1xf32>
    %16 = arith.divf %14, %15 : vector<8x1xf32>
    %cst_9 = arith.constant 9.99999974E-6 : f32
    %17 = vector.broadcast %cst_9 : f32 to vector<8x1xf32>
    %18 = arith.addf %16, %17 : vector<8x1xf32>
    %19 = math.rsqrt %18 : vector<8x1xf32>
    %20 = vector.broadcast %19 : vector<8x1xf32> to vector<8x32xf32>
    %21 = arith.mulf %11, %20 : vector<8x32xf32>
    %22 = vector.shape_cast %3 : vector<32xf32> to vector<1x32xf32>
    %23 = vector.broadcast %22 : vector<1x32xf32> to vector<8x32xf32>
    %24 = arith.mulf %21, %23 : vector<8x32xf32>
    %25 = vector.shape_cast %5 : vector<32xf32> to vector<1x32xf32>
    %26 = vector.broadcast %25 : vector<1x32xf32> to vector<8x32xf32>
    %27 = arith.addf %24, %26 : vector<8x32xf32>
    %28 = arith.truncf %27 : vector<8x32xf32> to vector<8x32xbf16>
    %c0_10 = arith.constant 0 : index
    %c0_11 = arith.constant 0 : index
    %29 = vector.load %arg2[%c0_10, %c0_11] : memref<32x96xbf16, #tpu.memory_space<vmem>>, vector<32x96xbf16>
    %cst_12 = arith.constant dense<0.000000e+00> : vector<8x96xf32>
    %30 = tpu.matmul %28, %29, %cst_12 {dimension_numbers = #tpu.dot_dimension_numbers<[1], [0], [0], [1], [0, 0, 1, 1], [], []>} : vector<8x32xbf16>, vector<32x96xbf16>, vector<8x96xf32> -> vector<8x96xf32>
    %c0_13 = arith.constant 0 : index
    %c0_14 = arith.constant 0 : index
    %31 = vector.load %arg3[%c0_13, %c0_14] : memref<1x96xf32, #tpu.memory_space<vmem>>, vector<1x96xf32>
    %32 = vector.shape_cast %31 : vector<1x96xf32> to vector<96xf32>
    %33 = vector.shape_cast %32 : vector<96xf32> to vector<1x96xf32>
    %34 = vector.broadcast %33 : vector<1x96xf32> to vector<8x96xf32>
    %35 = arith.addf %30, %34 : vector<8x96xf32>
    %36 = vector.extract_strided_slice %35 {offsets = [0, 0], sizes = [8, 24], strides = [1, 1]} : vector<8x96xf32> to vector<8x24xf32>
    %37 = vector.extract_strided_slice %35 {offsets = [0, 24], sizes = [8, 24], strides = [1, 1]} : vector<8x96xf32> to vector<8x24xf32>
    %38 = vector.extract_strided_slice %35 {offsets = [0, 48], sizes = [8, 24], strides = [1, 1]} : vector<8x96xf32> to vector<8x24xf32>
    %39 = vector.extract_strided_slice %35 {offsets = [0, 72], sizes = [8, 24], strides = [1, 1]} : vector<8x96xf32> to vector<8x24xf32>
    %40 = vector.shape_cast %36 : vector<8x24xf32> to vector<1x8x24xf32>
    %41 = vector.shape_cast %37 : vector<8x24xf32> to vector<1x8x24xf32>
    %42 = vector.shape_cast %38 : vector<8x24xf32> to vector<1x8x24xf32>
    %43 = vector.shape_cast %39 : vector<8x24xf32> to vector<1x8x24xf32>
    %44 = tpu.concatenate %40, %41, %42, %43 in 0 : vector<1x8x24xf32>, vector<1x8x24xf32>, vector<1x8x24xf32>, vector<1x8x24xf32> -> vector<4x8x24xf32>
    %45 = vector.extract_strided_slice %44 {offsets = [0, 0, 0], sizes = [4, 8, 8], strides = [1, 1, 1]} : vector<4x8x24xf32> to vector<4x8x8xf32>
    %cst_15 = arith.constant 0.353553385 : f32
    %46 = vector.broadcast %cst_15 : f32 to vector<4x8x8xf32>
    %47 = arith.mulf %45, %46 : vector<4x8x8xf32>
    %48 = vector.extract_strided_slice %44 {offsets = [0, 0, 8], sizes = [4, 8, 8], strides = [1, 1, 1]} : vector<4x8x24xf32> to vector<4x8x8xf32>
    %49 = vector.extract_strided_slice %44 {offsets = [0, 0, 16], sizes = [4, 8, 8], strides = [1, 1, 1]} : vector<4x8x24xf32> to vector<4x8x8xf32>
    %50 = arith.truncf %47 : vector<4x8x8xf32> to vector<4x8x8xbf16>
    %51 = arith.truncf %48 : vector<4x8x8xf32> to vector<4x8x8xbf16>
    "tpu.trace_start"() <{level = 10 : i32, message = "hqc,hkc->hqk"}> : () -> ()
    %cst_16 = arith.constant dense<0.000000e+00> : vector<4x8x8xf32>
    %52 = tpu.matmul %50, %51, %cst_16 {dimension_numbers = #tpu.dot_dimension_numbers<[2], [2], [1], [1], [0, 0, 0, 1, 1, 1], [0], [0]>} : vector<4x8x8xbf16>, vector<4x8x8xbf16>, vector<4x8x8xf32> -> vector<4x8x8xf32>
    "tpu.trace_stop"() : () -> ()
    %cst_17 = arith.constant dense<0xFF800000> : vector<4x8xf32>
    %53 = vector.multi_reduction <maximumf>, %52, %cst_17 [2] : vector<4x8x8xf32> to vector<4x8xf32>
    %54 = vector.shape_cast %53 : vector<4x8xf32> to vector<4x8x1xf32>
    %55 = vector.broadcast %54 : vector<4x8x1xf32> to vector<4x8x8xf32>
    %56 = arith.subf %52, %55 : vector<4x8x8xf32>
    %57 = math.exp %56 : vector<4x8x8xf32>
    %cst_18 = arith.constant dense<0.000000e+00> : vector<4x8xf32>
    %58 = vector.multi_reduction <add>, %57, %cst_18 [2] : vector<4x8x8xf32> to vector<4x8xf32>
    %59 = vector.shape_cast %58 : vector<4x8xf32> to vector<4x8x1xf32>
    %60 = tpu.reciprocal %59 {approx = true} : vector<4x8x1xf32> -> vector<4x8x1xf32>
    %61 = vector.broadcast %60 : vector<4x8x1xf32> to vector<4x8x8xf32>
    %62 = arith.mulf %57, %61 : vector<4x8x8xf32>
    %63 = arith.truncf %62 : vector<4x8x8xf32> to vector<4x8x8xbf16>
    %64 = arith.truncf %49 : vector<4x8x8xf32> to vector<4x8x8xbf16>
    "tpu.trace_start"() <{level = 10 : i32, message = "hqk,hkc->hqc"}> : () -> ()
    %cst_19 = arith.constant dense<0.000000e+00> : vector<4x8x8xf32>
    %65 = tpu.matmul %63, %64, %cst_19 {dimension_numbers = #tpu.dot_dimension_numbers<[2], [1], [1], [2], [0, 0, 0, 1, 1, 2], [0], [0]>} : vector<4x8x8xbf16>, vector<4x8x8xbf16>, vector<4x8x8xf32> -> vector<4x8x8xf32>
    "tpu.trace_stop"() : () -> ()
    %66 = vector.extract_strided_slice %65 {offsets = [0, 0, 0], sizes = [1, 8, 8], strides = [1, 1, 1]} : vector<4x8x8xf32> to vector<1x8x8xf32>
    %67 = vector.shape_cast %66 : vector<1x8x8xf32> to vector<8x8xf32>
    %68 = vector.extract_strided_slice %65 {offsets = [1, 0, 0], sizes = [1, 8, 8], strides = [1, 1, 1]} : vector<4x8x8xf32> to vector<1x8x8xf32>
    %69 = vector.shape_cast %68 : vector<1x8x8xf32> to vector<8x8xf32>
    %70 = vector.extract_strided_slice %65 {offsets = [2, 0, 0], sizes = [1, 8, 8], strides = [1, 1, 1]} : vector<4x8x8xf32> to vector<1x8x8xf32>
    %71 = vector.shape_cast %70 : vector<1x8x8xf32> to vector<8x8xf32>
    %72 = vector.extract_strided_slice %65 {offsets = [3, 0, 0], sizes = [1, 8, 8], strides = [1, 1, 1]} : vector<4x8x8xf32> to vector<1x8x8xf32>
    %73 = vector.shape_cast %72 : vector<1x8x8xf32> to vector<8x8xf32>
    %74 = tpu.concatenate %67, %69, %71, %73 in 1 : vector<8x8xf32>, vector<8x8xf32>, vector<8x8xf32>, vector<8x8xf32> -> vector<8x32xf32>
    %75 = arith.truncf %74 : vector<8x32xf32> to vector<8x32xbf16>
    %c0_20 = arith.constant 0 : index
    %c0_21 = arith.constant 0 : index
    %76 = vector.load %arg4[%c0_20, %c0_21] : memref<32x32xbf16, #tpu.memory_space<vmem>>, vector<32x32xbf16>
    %cst_22 = arith.constant dense<0.000000e+00> : vector<8x32xf32>
    %77 = tpu.matmul %75, %76, %cst_22 {dimension_numbers = #tpu.dot_dimension_numbers<[1], [0], [0], [1], [0, 0, 1, 1], [], []>} : vector<8x32xbf16>, vector<32x32xbf16>, vector<8x32xf32> -> vector<8x32xf32>
    %c0_23 = arith.constant 0 : index
    %c0_24 = arith.constant 0 : index
    %78 = vector.load %arg5[%c0_23, %c0_24] : memref<1x32xf32, #tpu.memory_space<vmem>>, vector<1x32xf32>
    %79 = vector.shape_cast %78 : vector<1x32xf32> to vector<32xf32>
    %80 = vector.shape_cast %79 : vector<32xf32> to vector<1x32xf32>
    %81 = vector.broadcast %80 : vector<1x32xf32> to vector<8x32xf32>
    %82 = arith.addf %77, %81 : vector<8x32xf32>
    %83 = arith.addf %1, %82 : vector<8x32xf32>
    %c0_25 = arith.constant 0 : index
    %c0_26 = arith.constant 0 : index
    %84 = vector.load %arg8[%c0_25, %c0_26] : memref<1x32xf32, #tpu.memory_space<vmem>>, vector<1x32xf32>
    %85 = vector.shape_cast %84 : vector<1x32xf32> to vector<32xf32>
    %c0_27 = arith.constant 0 : index
    %c0_28 = arith.constant 0 : index
    %86 = vector.load %arg9[%c0_27, %c0_28] : memref<1x32xf32, #tpu.memory_space<vmem>>, vector<1x32xf32>
    %87 = vector.shape_cast %86 : vector<1x32xf32> to vector<32xf32>
    %cst_29 = arith.constant dense<0.000000e+00> : vector<8xf32>
    %88 = vector.multi_reduction <add>, %83, %cst_29 [1] : vector<8x32xf32> to vector<8xf32>
    %89 = vector.shape_cast %88 : vector<8xf32> to vector<8x1xf32>
    %cst_30 = arith.constant 3.200000e+01 : f32
    %90 = vector.broadcast %cst_30 : f32 to vector<8x1xf32>
    %91 = arith.divf %89, %90 : vector<8x1xf32>
    %92 = vector.broadcast %91 : vector<8x1xf32> to vector<8x32xf32>
    %93 = arith.subf %83, %92 : vector<8x32xf32>
    %94 = arith.mulf %93, %93 : vector<8x32xf32>
    %cst_31 = arith.constant dense<0.000000e+00> : vector<8xf32>
    %95 = vector.multi_reduction <add>, %94, %cst_31 [1] : vector<8x32xf32> to vector<8xf32>
    %96 = vector.shape_cast %95 : vector<8xf32> to vector<8x1xf32>
    %cst_32 = arith.constant 3.200000e+01 : f32
    %97 = vector.broadcast %cst_32 : f32 to vector<8x1xf32>
    %98 = arith.divf %96, %97 : vector<8x1xf32>
    %cst_33 = arith.constant 9.99999974E-6 : f32
    %99 = vector.broadcast %cst_33 : f32 to vector<8x1xf32>
    %100 = arith.addf %98, %99 : vector<8x1xf32>
    %101 = math.rsqrt %100 : vector<8x1xf32>
    %102 = vector.broadcast %101 : vector<8x1xf32> to vector<8x32xf32>
    %103 = arith.mulf %93, %102 : vector<8x32xf32>
    %104 = vector.shape_cast %85 : vector<32xf32> to vector<1x32xf32>
    %105 = vector.broadcast %104 : vector<1x32xf32> to vector<8x32xf32>
    %106 = arith.mulf %103, %105 : vector<8x32xf32>
    %107 = vector.shape_cast %87 : vector<32xf32> to vector<1x32xf32>
    %108 = vector.broadcast %107 : vector<1x32xf32> to vector<8x32xf32>
    %109 = arith.addf %106, %108 : vector<8x32xf32>
    %110 = arith.truncf %109 : vector<8x32xf32> to vector<8x32xbf16>
    %c0_34 = arith.constant 0 : index
    %c0_35 = arith.constant 0 : index
    %111 = vector.load %arg10[%c0_34, %c0_35] : memref<32x128xbf16, #tpu.memory_space<vmem>>, vector<32x128xbf16>
    %cst_36 = arith.constant dense<0.000000e+00> : vector<8x128xf32>
    %112 = tpu.matmul %110, %111, %cst_36 {dimension_numbers = #tpu.dot_dimension_numbers<[1], [0], [0], [1], [0, 0, 1, 1], [], []>} : vector<8x32xbf16>, vector<32x128xbf16>, vector<8x128xf32> -> vector<8x128xf32>
    %c0_37 = arith.constant 0 : index
    %c0_38 = arith.constant 0 : index
    %113 = vector.load %arg11[%c0_37, %c0_38] : memref<1x128xf32, #tpu.memory_space<vmem>>, vector<1x128xf32>
    %114 = vector.shape_cast %113 : vector<1x128xf32> to vector<128xf32>
    %115 = vector.shape_cast %114 : vector<128xf32> to vector<1x128xf32>
    %116 = vector.broadcast %115 : vector<1x128xf32> to vector<8x128xf32>
    %117 = arith.addf %112, %116 : vector<8x128xf32>
    %cst_39 = arith.constant 0.000000e+00 : f32
    %118 = vector.broadcast %cst_39 : f32 to vector<8x128xf32>
    %119 = arith.maximumf %117, %118 : vector<8x128xf32>
    %120 = arith.truncf %119 : vector<8x128xf32> to vector<8x128xbf16>
    %c0_40 = arith.constant 0 : index
    %c0_41 = arith.constant 0 : index
    %121 = vector.load %arg12[%c0_40, %c0_41] : memref<128x32xbf16, #tpu.memory_space<vmem>>, vector<128x32xbf16>
    %cst_42 = arith.constant dense<0.000000e+00> : vector<8x32xf32>
    %122 = tpu.matmul %120, %121, %cst_42 {dimension_numbers = #tpu.dot_dimension_numbers<[1], [0], [0], [1], [0, 0, 1, 1], [], []>} : vector<8x128xbf16>, vector<128x32xbf16>, vector<8x32xf32> -> vector<8x32xf32>
    %c0_43 = arith.constant 0 : index
    %c0_44 = arith.constant 0 : index
    %123 = vector.load %arg13[%c0_43, %c0_44] : memref<1x32xf32, #tpu.memory_space<vmem>>, vector<1x32xf32>
    %124 = vector.shape_cast %123 : vector<1x32xf32> to vector<32xf32>
    %125 = vector.shape_cast %124 : vector<32xf32> to vector<1x32xf32>
    %126 = vector.broadcast %125 : vector<1x32xf32> to vector<8x32xf32>
    %127 = arith.addf %122, %126 : vector<8x32xf32>
    %128 = arith.addf %83, %127 : vector<8x32xf32>
    %c0_45 = arith.constant 0 : index
    %c0_46 = arith.constant 0 : index
    %c0_47 = arith.constant 0 : index
    %129 = vector.load %arg18[%c0_45, %c0_46, %c0_47] : memref<1x8x32xf32, #tpu.memory_space<vmem>>, vector<1x8x32xf32>
    %130 = vector.shape_cast %129 : vector<1x8x32xf32> to vector<8x32xf32>
    %131 = vector.shape_cast %128 : vector<8x32xf32> to vector<1x8x32xf32>
    tpu.vector_store %arg18[%c0_45, %c0_46, %c0_47], %131 {strides = array<i32>} : memref<1x8x32xf32, #tpu.memory_space<vmem>>, vector<1x8x32xf32>,
    %132 = arith.truncf %128 : vector<8x32xf32> to vector<8x32xbf16>
    %c0_48 = arith.constant 0 : index
    %c0_49 = arith.constant 0 : index
    %133 = vector.load %arg14[%c0_48, %c0_49] : memref<32x32xbf16, #tpu.memory_space<vmem>>, vector<32x32xbf16>
    %cst_50 = arith.constant dense<0.000000e+00> : vector<8x32xf32>
    %134 = tpu.matmul %132, %133, %cst_50 {dimension_numbers = #tpu.dot_dimension_numbers<[1], [0], [0], [1], [0, 0, 1, 1], [], []>} : vector<8x32xbf16>, vector<32x32xbf16>, vector<8x32xf32> -> vector<8x32xf32>
    %c0_51 = arith.constant 0 : index
    %c0_52 = arith.constant 0 : index
    %135 = vector.load %arg15[%c0_51, %c0_52] : memref<1x32xf32, #tpu.memory_space<vmem>>, vector<1x32xf32>
    %136 = vector.shape_cast %135 : vector<1x32xf32> to vector<32xf32>
    %137 = vector.shape_cast %136 : vector<32xf32> to vector<1x32xf32>
    %138 = vector.broadcast %137 : vector<1x32xf32> to vector<8x32xf32>
    %139 = arith.addf %134, %138 : vector<8x32xf32>
    %cst_53 = arith.constant 0.000000e+00 : f32
    %140 = vector.broadcast %cst_53 : f32 to vector<8x32xf32>
    %141 = arith.maximumf %139, %140 : vector<8x32xf32>
    %142 = arith.truncf %141 : vector<8x32xf32> to vector<8x32xbf16>
    %c0_54 = arith.constant 0 : index
    %c0_55 = arith.constant 0 : index
    %143 = vector.load %arg16[%c0_54, %c0_55] : memref<32x128xbf16, #tpu.memory_space<vmem>>, vector<32x128xbf16>
    %cst_56 = arith.constant dense<0.000000e+00> : vector<8x128xf32>
    %144 = tpu.matmul %142, %143, %cst_56 {dimension_numbers = #tpu.dot_dimension_numbers<[1], [0], [0], [1], [0, 0, 1, 1], [], []>} : vector<8x32xbf16>, vector<32x128xbf16>, vector<8x128xf32> -> vector<8x128xf32>
    %c0_57 = arith.constant 0 : index
    %c0_58 = arith.constant 0 : index
    %145 = vector.load %arg17[%c0_57, %c0_58] : memref<1x128xf32, #tpu.memory_space<vmem>>, vector<1x128xf32>
    %146 = vector.shape_cast %145 : vector<1x128xf32> to vector<128xf32>
    %147 = vector.shape_cast %146 : vector<128xf32> to vector<1x128xf32>
    %148 = vector.broadcast %147 : vector<1x128xf32> to vector<8x128xf32>
    %149 = arith.addf %144, %148 : vector<8x128xf32>
    %c0_59 = arith.constant 0 : index
    %c0_60 = arith.constant 0 : index
    %c0_61 = arith.constant 0 : index
    %150 = vector.load %arg19[%c0_59, %c0_60, %c0_61] : memref<1x8x128xf32, #tpu.memory_space<vmem>>, vector<1x8x128xf32>
    %151 = vector.shape_cast %150 : vector<1x8x128xf32> to vector<8x128xf32>
    %152 = vector.shape_cast %149 : vector<8x128xf32> to vector<1x8x128xf32>
    tpu.vector_store %arg19[%c0_59, %c0_60, %c0_61], %152 {strides = array<i32>} : memref<1x8x128xf32, #tpu.memory_space<vmem>>, vector<1x8x128xf32>,
    return
  }
  func.func @transform_0(%arg0: i32) -> (i32, i32, i32) {
    %c0_i32 = arith.constant 0 : i32
    %c0_i32_0 = arith.constant 0 : i32
    %c0_i32_1 = arith.constant 0 : i32
    return %arg0, %c0_i32, %c0_i32_0 : i32, i32, i32
  }
  func.func @transform_1(%arg0: i32) -> (i32, i32) {
    %c0_i32 = arith.constant 0 : i32
    %c0_i32_0 = arith.constant 0 : i32
    %c0_i32_1 = arith.constant 0 : i32
    return %c0_i32, %c0_i32_0 : i32, i32
  }
  func.func @transform_2(%arg0: i32) -> (i32, i32) {
    %c0_i32 = arith.constant 0 : i32
    %c0_i32_0 = arith.constant 0 : i32
    %c0_i32_1 = arith.constant 0 : i32
    return %c0_i32, %c0_i32_0 : i32, i32
  }
  func.func @transform_3(%arg0: i32) -> (i32, i32) {
    %c0_i32 = arith.constant 0 : i32
    %c0_i32_0 = arith.constant 0 : i32
    %c0_i32_1 = arith.constant 0 : i32
    return %c0_i32, %c0_i32_0 : i32, i32
  }
  func.func @transform_4(%arg0: i32) -> (i32, i32) {
    %c0_i32 = arith.constant 0 : i32
    %c0_i32_0 = arith.constant 0 : i32
    %c0_i32_1 = arith.constant 0 : i32
    return %c0_i32, %c0_i32_0 : i32, i32
  }
  func.func @transform_5(%arg0: i32) -> (i32, i32) {
    %c0_i32 = arith.constant 0 : i32
    %c0_i32_0 = arith.constant 0 : i32
    %c0_i32_1 = arith.constant 0 : i32
    return %c0_i32, %c0_i32_0 : i32, i32
  }
  func.func @transform_6(%arg0: i32) -> (i32, i32) {
    %c0_i32 = arith.constant 0 : i32
    %c0_i32_0 = arith.constant 0 : i32
    %c0_i32_1 = arith.constant 0 : i32
    return %c0_i32, %c0_i32_0 : i32, i32
  }
  func.func @transform_7(%arg0: i32) -> (i32, i32) {
    %c0_i32 = arith.constant 0 : i32
    %c0_i32_0 = arith.constant 0 : i32
    %c0_i32_1 = arith.constant 0 : i32
    return %c0_i32, %c0_i32_0 : i32, i32
  }
  func.func @transform_8(%arg0: i32) -> (i32, i32) {
    %c0_i32 = arith.constant 0 : i32
    %c0_i32_0 = arith.constant 0 : i32
    %c0_i32_1 = arith.constant 0 : i32
    return %c0_i32, %c0_i32_0 : i32, i32
  }
  func.func @transform_9(%arg0: i32) -> (i32, i32) {
    %c0_i32 = arith.constant 0 : i32
    %c0_i32_0 = arith.constant 0 : i32
    %c0_i32_1 = arith.constant 0 : i32
    return %c0_i32, %c0_i32_0 : i32, i32
  }
  func.func @transform_10(%arg0: i32) -> (i32, i32) {
    %c0_i32 = arith.constant 0 : i32
    %c0_i32_0 = arith.constant 0 : i32
    %c0_i32_1 = arith.constant 0 : i32
    return %c0_i32, %c0_i32_0 : i32, i32
  }
  func.func @transform_11(%arg0: i32) -> (i32, i32) {
    %c0_i32 = arith.constant 0 : i32
    %c0_i32_0 = arith.constant 0 : i32
    %c0_i32_1 = arith.constant 0 : i32
    return %c0_i32, %c0_i32_0 : i32, i32
  }
  func.func @transform_12(%arg0: i32) -> (i32, i32) {
    %c0_i32 = arith.constant 0 : i32
    %c0_i32_0 = arith.constant 0 : i32
    %c0_i32_1 = arith.constant 0 : i32
    return %c0_i32, %c0_i32_0 : i32, i32
  }
  func.func @transform_13(%arg0: i32) -> (i32, i32) {
    %c0_i32 = arith.constant 0 : i32
    %c0_i32_0 = arith.constant 0 : i32
    %c0_i32_1 = arith.constant 0 : i32
    return %c0_i32, %c0_i32_0 : i32, i32
  }
  func.func @transform_14(%arg0: i32) -> (i32, i32) {
    %c0_i32 = arith.constant 0 : i32
    %c0_i32_0 = arith.constant 0 : i32
    %c0_i32_1 = arith.constant 0 : i32
    return %c0_i32, %c0_i32_0 : i32, i32
  }
  func.func @transform_15(%arg0: i32) -> (i32, i32) {
    %c0_i32 = arith.constant 0 : i32
    %c0_i32_0 = arith.constant 0 : i32
    %c0_i32_1 = arith.constant 0 : i32
    return %c0_i32, %c0_i32_0 : i32, i32
  }
  func.func @transform_16(%arg0: i32) -> (i32, i32) {
    %c0_i32 = arith.constant 0 : i32
    %c0_i32_0 = arith.constant 0 : i32
    %c0_i32_1 = arith.constant 0 : i32
    return %c0_i32, %c0_i32_0 : i32, i32
  }
  func.func @transform_17(%arg0: i32) -> (i32, i32, i32) {
    %c0_i32 = arith.constant 0 : i32
    %c0_i32_0 = arith.constant 0 : i32
    %c0_i32_1 = arith.constant 0 : i32
    return %arg0, %c0_i32, %c0_i32_0 : i32, i32, i32
  }
  func.func @transform_18(%arg0: i32) -> (i32, i32, i32) {
    %c0_i32 = arith.constant 0 : i32
    %c0_i32_0 = arith.constant 0 : i32
    %c0_i32_1 = arith.constant 0 : i32
    return %arg0, %c0_i32, %c0_i32_0 : i32, i32, i32
  }
}

</mosaic_0001>

<llo_original>
// kernel: tpu_custom_call.1
$region0: #{tpu_custom_call.1}
  #allocation0 [shape = 'u32[]', space=smem, size = 0x4, offset = 0x4, fixed_abs, tag = 'smem constant byte address 0x4 - core index']
  #allocation1 [shape = 'u32[144,128]{1,0:T(1,128)}', space=vmem, size = 0x12000, scoped, tag = 'internal scratch']
  %s0 = inlined_call_operand.vmem [shape: f32[2,8,32], index: 0, kind: input, shape index: {}]
  %s1 = inlined_call_operand.vmem [shape: bf16[32,96], index: 1, kind: input, shape index: {}]
  %s2 = inlined_call_operand.hbm [shape: f32[1,96], index: 2, kind: input, shape index: {}]
  %s3 = inlined_call_operand.vmem [shape: bf16[32,32], index: 3, kind: input, shape index: {}]
  %s4 = inlined_call_operand.hbm [shape: f32[1,32], index: 4, kind: input, shape index: {}]
  %s5 = inlined_call_operand.hbm [shape: f32[1,32], index: 5, kind: input, shape index: {}]
  %s6 = inlined_call_operand.hbm [shape: f32[1,32], index: 6, kind: input, shape index: {}]
  %s7 = inlined_call_operand.hbm [shape: f32[1,32], index: 7, kind: input, shape index: {}]
  %s8 = inlined_call_operand.hbm [shape: f32[1,32], index: 8, kind: input, shape index: {}]
  %s9 = inlined_call_operand.vmem [shape: bf16[32,128], index: 9, kind: input, shape index: {}]
  %s10 = inlined_call_operand.vmem [shape: f32[1,128], index: 10, kind: input, shape index: {}]
  %s11 = inlined_call_operand.vmem [shape: bf16[128,32], index: 11, kind: input, shape index: {}]
  %s12 = inlined_call_operand.vmem [shape: f32[1,32], index: 12, kind: input, shape index: {}]
  %s13 = inlined_call_operand.vmem [shape: bf16[32,32], index: 13, kind: input, shape index: {}]
  %s14 = inlined_call_operand.vmem [shape: f32[1,32], index: 14, kind: input, shape index: {}]
  %s15 = inlined_call_operand.vmem [shape: bf16[32,128], index: 15, kind: input, shape index: {}]
  %s16 = inlined_call_operand.vmem [shape: f32[1,128], index: 16, kind: input, shape index: {}]
  %s17 = inlined_call_operand.hbm [shape: f32[2,8,32], index: 17, kind: output, shape index: {0}]
  %s18 = inlined_call_operand.hbm [shape: f32[2,8,128], index: 18, kind: output, shape index: {1}]
  %19 = xla_tuple %s17, %s18
  %s20 = sld [smem:[#allocation0]]
  $region133: #{tpu_custom_call.1} parent=0
    _
  %s22 = ssub.s32 1, %s20
  %s23 = scalar_select 0, %s22, %s20
  $region1: #{tpu_custom_call.1} parent=0
    #allocation2 [shape = 'u8[512]{0}', space=vmem, size = 0x400, scoped, tag = 'input window, operand 2, single buffered']
    #allocation3 [shape = 's32[2]{0}', space=sflag, size = 0x8, scoped, tag = 'scoped memory for tpu_custom_call.1']
    #allocation4 [shape = 's32[2]{0}', space=sflag, size = 0x8, scoped, tag = 'scoped memory for tpu_custom_call.1']
    #allocation5 [shape = 'u8[512]{0}', space=vmem, size = 0x400, scoped, tag = 'input window, operand 4, single buffered']
    #allocation6 [shape = 's32[1]{0}', space=sflag, size = 0x4, scoped, tag = 'scoped memory for tpu_custom_call.1']
    #allocation7 [shape = 'u8[512]{0}', space=vmem, size = 0x400, scoped, tag = 'input window, operand 5, single buffered']
    #allocation8 [shape = 'u8[512]{0}', space=vmem, size = 0x400, scoped, tag = 'input window, operand 6, single buffered']
    #allocation9 [shape = 's32[1]{0}', space=sflag, size = 0x4, scoped, tag = 'scoped memory for tpu_custom_call.1']
    #allocation10 [shape = 'u8[512]{0}', space=vmem, size = 0x400, scoped, tag = 'input window, operand 7, single buffered']
    #allocation11 [shape = 'u8[512]{0}', space=vmem, size = 0x400, scoped, tag = 'input window, operand 8, single buffered']
    #allocation12 [shape = 's32[1]{0}', space=sflag, size = 0x4, scoped, tag = 'scoped memory for tpu_custom_call.1']
    #allocation13 [shape = 'u8[8192]{0}', space=vmem, size = 0x2000, scoped, tag = 'output window, operand 0']
    #allocation14 [shape = 'u8[8192]{0}', space=vmem, size = 0x2000, scoped, tag = 'output window, operand 1']
    #allocation15 [shape = 's32[2]{0}', space=sflag, size = 0x8, scoped, tag = 'scoped memory for tpu_custom_call.1']
    %24 = vsyncpa [#allocation3], 0
    %25 = vsyncpa [#allocation6], 0
    %26 = vsyncpa [#allocation9], 0
    %27 = vsyncpa [#allocation12], 0
    %28 = vsyncpa [#allocation4], 0
    %s29 = scalar_lea.sflag [#allocation4], 1
    %30 = vsyncpa %s29, 0
    %31 = vsyncpa [#allocation15], 0
    %s32 = scalar_lea.sflag [#allocation15], 1
    %33 = vsyncpa %s32, 0
    loop: start=0, step=1, limit=4
    $region2: #{tpu_custom_call.1} parent=1 // loop_pre_header
      _
    $region3: #{tpu_custom_call.1} parent=1 // loop_header
      %s35 = sphi 0, %s39
      %p36 = scmp.ge.s32.totalorder %s35, 4
      %s45 = sphi 0, %s47
      %s48 = sphi 0, %s45
      %s49 = sphi 0, %s48
      %s65 = sphi 0, %s49
      %s69 = sphi 0, %s69
      %s71 = sphi 0, %s69
      %s72 = sphi 0, %s71
      %s86 = sphi 0, %s72
      %s90 = sphi 0, %s90
      %s92 = sphi 0, %s90
      %s93 = sphi 0, %s92
      %s107 = sphi 0, %s93
      %s111 = sphi 0, %s111
      %s113 = sphi 0, %s111
      %s114 = sphi 0, %s113
      %s128 = sphi 0, %s114
      %s132 = sphi 0, %s132
      %s134 = sphi 0, %s132
      %s135 = sphi 0, %s134
      %s149 = sphi 0, %s135
      %s153 = sphi 0, %s153
      %s155 = sphi 0, %s153
      %s156 = sphi 0, %s155
      %s170 = sphi 0, %s156
      %s174 = sphi 0, %s174
      %s176 = sphi 0, %s174
      %s177 = sphi 0, %s176
      %s191 = sphi 0, %s177
      %s195 = sphi 0, %s195
      %s197 = sphi 0, %s195
      %s198 = sphi 0, %s197
      %s212 = sphi 0, %s198
      %s216 = sphi 0, %s216
      %s218 = sphi 0, %s216
      %s219 = sphi 0, %s218
      %s233 = sphi 0, %s219
      %s237 = sphi 0, %s237
      %s239 = sphi 0, %s237
      %s240 = sphi 0, %s239
      %s254 = sphi 0, %s240
      %s258 = sphi 0, %s258
      %s260 = sphi 0, %s258
      %s261 = sphi 0, %s260
      %s275 = sphi 0, %s261
      %s279 = sphi 0, %s279
      %s281 = sphi 0, %s279
      %s282 = sphi 0, %s281
      %s296 = sphi 0, %s282
      %s300 = sphi 0, %s300
      %s302 = sphi 0, %s300
      %s303 = sphi 0, %s302
      %s317 = sphi 0, %s303
      %s321 = sphi 0, %s321
      %s323 = sphi 0, %s321
      %s324 = sphi 0, %s323
      %s338 = sphi 0, %s324
      %s342 = sphi 0, %s342
      %s344 = sphi 0, %s342
      %s345 = sphi 0, %s344
      %s359 = sphi 0, %s345
      %s363 = sphi 0, %s363
      %s365 = sphi 0, %s363
      %s366 = sphi 0, %s365
      %s380 = sphi 0, %s366
      %s384 = sphi 0, %s384
      %s386 = sphi 0, %s384
      %s387 = sphi 0, %s386
      %s401 = sphi 0, %s387
      %s407 = sphi 0, %s409
      %s410 = sphi 0, %s407
      %s411 = sphi 0, %s410
      %s427 = sphi 0, %s411
      %s433 = sphi 0, %s435
      %s436 = sphi 0, %s433
      %s437 = sphi 0, %s436
      %s453 = sphi 0, %s437
    $region4: #{tpu_custom_call.1} parent=1 // loop_header_branch
      %38 = sbr.rel (%p36) target = $region8
    $region5: #{tpu_custom_call.1} parent=1 // loop_body
      %s40 = ssub.s32 %s35, 1
      %s41 = ssub.s32 %s35, 2
      %s42 = sadd.s32 %s35, 1
      %s43 = ssub.s32 %s35, %s42
      %p44 = scmp.eq.s32.totalorder %s43, 0
      %s46 = sadd.s32 %s45, 1
      %s47 = scalar_select %p44, %s45, %s46
      %p50 = pneg %p44
      %p51 = scmp.eq.s32.totalorder %s35, 1
      %p52 = por %p50, %p51
      %p53 = scmp.ne.s32.totalorder %s45, %s48
      %p54 = scmp.eq.s32.totalorder %s35, 0
      %p55 = por %p53, %p54
      %p56 = scmp.ne.s32.totalorder %s45, %s48
      %p57 = scmp.eq.s32.totalorder %s40, 1
      %p58 = por %p56, %p57
      %p59 = scmp.ne.s32.totalorder %s48, %s49
      %p60 = scmp.eq.s32.totalorder %s40, 0
      %p61 = por %p59, %p60
      %p62 = scmp.ne.s32.totalorder %s48, %s49
      %p63 = scmp.eq.s32.totalorder %s41, 1
      %p64 = por %p62, %p63
      %p66 = scmp.ne.s32.totalorder %s49, %s65
      %p67 = scmp.eq.s32.totalorder %s41, 0
      %p68 = por %p66, %p67
      %s70 = sadd.s32 %s69, 1
      %p73 = scmp.eq.s32.totalorder %s35, 1
      %p74 = scmp.ne.s32.totalorder %s69, %s71
      %p75 = scmp.eq.s32.totalorder %s35, 0
      %p76 = por %p74, %p75
      %p77 = scmp.ne.s32.totalorder %s69, %s71
      %p78 = scmp.eq.s32.totalorder %s40, 1
      %p79 = por %p77, %p78
      %p80 = scmp.ne.s32.totalorder %s71, %s72
      %p81 = scmp.eq.s32.totalorder %s40, 0
      %p82 = por %p80, %p81
      %p83 = scmp.ne.s32.totalorder %s71, %s72
      %p84 = scmp.eq.s32.totalorder %s41, 1
      %p85 = por %p83, %p84
      %p87 = scmp.ne.s32.totalorder %s72, %s86
      %p88 = scmp.eq.s32.totalorder %s41, 0
      %p89 = por %p87, %p88
      %s91 = sadd.s32 %s90, 1
      %p94 = scmp.eq.s32.totalorder %s35, 1
      %p95 = scmp.ne.s32.totalorder %s90, %s92
      %p96 = scmp.eq.s32.totalorder %s35, 0
      %p97 = por %p95, %p96
      %p98 = scmp.ne.s32.totalorder %s90, %s92
      %p99 = scmp.eq.s32.totalorder %s40, 1
      %p100 = por %p98, %p99
      %p101 = scmp.ne.s32.totalorder %s92, %s93
      %p102 = scmp.eq.s32.totalorder %s40, 0
      %p103 = por %p101, %p102
      %p104 = scmp.ne.s32.totalorder %s92, %s93
      %p105 = scmp.eq.s32.totalorder %s41, 1
      %p106 = por %p104, %p105
      %p108 = scmp.ne.s32.totalorder %s93, %s107
      %p109 = scmp.eq.s32.totalorder %s41, 0
      %p110 = por %p108, %p109
      %s112 = sadd.s32 %s111, 1
      %p115 = scmp.eq.s32.totalorder %s35, 1
      %p116 = scmp.ne.s32.totalorder %s111, %s113
      %p117 = scmp.eq.s32.totalorder %s35, 0
      %p118 = por %p116, %p117
      %p119 = scmp.ne.s32.totalorder %s111, %s113
      %p120 = scmp.eq.s32.totalorder %s40, 1
      %p121 = por %p119, %p120
      %p122 = scmp.ne.s32.totalorder %s113, %s114
      %p123 = scmp.eq.s32.totalorder %s40, 0
      %p124 = por %p122, %p123
      %p125 = scmp.ne.s32.totalorder %s113, %s114
      %p126 = scmp.eq.s32.totalorder %s41, 1
      %p127 = por %p125, %p126
      %p129 = scmp.ne.s32.totalorder %s114, %s128
      %p130 = scmp.eq.s32.totalorder %s41, 0
      %p131 = por %p129, %p130
      %s133 = sadd.s32 %s132, 1
      %p136 = scmp.eq.s32.totalorder %s35, 1
      %p137 = scmp.ne.s32.totalorder %s132, %s134
      %p138 = scmp.eq.s32.totalorder %s35, 0
      %p139 = por %p137, %p138
      %p140 = scmp.ne.s32.totalorder %s132, %s134
      %p141 = scmp.eq.s32.totalorder %s40, 1
      %p142 = por %p140, %p141
      %p143 = scmp.ne.s32.totalorder %s134, %s135
      %p144 = scmp.eq.s32.totalorder %s40, 0
      %p145 = por %p143, %p144
      %p146 = scmp.ne.s32.totalorder %s134, %s135
      %p147 = scmp.eq.s32.totalorder %s41, 1
      %p148 = por %p146, %p147
      %p150 = scmp.ne.s32.totalorder %s135, %s149
      %p151 = scmp.eq.s32.totalorder %s41, 0
      %p152 = por %p150, %p151
      %s154 = sadd.s32 %s153, 1
      %p157 = scmp.eq.s32.totalorder %s35, 1
      %p158 = scmp.ne.s32.totalorder %s153, %s155
      %p159 = scmp.eq.s32.totalorder %s35, 0
      %p160 = por %p158, %p159
      %p161 = scmp.ne.s32.totalorder %s153, %s155
      %p162 = scmp.eq.s32.totalorder %s40, 1
      %p163 = por %p161, %p162
      %p164 = scmp.ne.s32.totalorder %s155, %s156
      %p165 = scmp.eq.s32.totalorder %s40, 0
      %p166 = por %p164, %p165
      %p167 = scmp.ne.s32.totalorder %s155, %s156
      %p168 = scmp.eq.s32.totalorder %s41, 1
      %p169 = por %p167, %p168
      %p171 = scmp.ne.s32.totalorder %s156, %s170
      %p172 = scmp.eq.s32.totalorder %s41, 0
      %p173 = por %p171, %p172
      %s175 = sadd.s32 %s174, 1
      %p178 = scmp.eq.s32.totalorder %s35, 1
      %p179 = scmp.ne.s32.totalorder %s174, %s176
      %p180 = scmp.eq.s32.totalorder %s35, 0
      %p181 = por %p179, %p180
      %p182 = scmp.ne.s32.totalorder %s174, %s176
      %p183 = scmp.eq.s32.totalorder %s40, 1
      %p184 = por %p182, %p183
      %p185 = scmp.ne.s32.totalorder %s176, %s177
      %p186 = scmp.eq.s32.totalorder %s40, 0
      %p187 = por %p185, %p186
      %p188 = scmp.ne.s32.totalorder %s176, %s177
      %p189 = scmp.eq.s32.totalorder %s41, 1
      %p190 = por %p188, %p189
      %p192 = scmp.ne.s32.totalorder %s177, %s191
      %p193 = scmp.eq.s32.totalorder %s41, 0
      %p194 = por %p192, %p193
      %s196 = sadd.s32 %s195, 1
      %p199 = scmp.eq.s32.totalorder %s35, 1
      %p200 = scmp.ne.s32.totalorder %s195, %s197
      %p201 = scmp.eq.s32.totalorder %s35, 0
      %p202 = por %p200, %p201
      %p203 = scmp.ne.s32.totalorder %s195, %s197
      %p204 = scmp.eq.s32.totalorder %s40, 1
      %p205 = por %p203, %p204
      %p206 = scmp.ne.s32.totalorder %s197, %s198
      %p207 = scmp.eq.s32.totalorder %s40, 0
      %p208 = por %p206, %p207
      %p209 = scmp.ne.s32.totalorder %s197, %s198
      %p210 = scmp.eq.s32.totalorder %s41, 1
      %p211 = por %p209, %p210
      %p213 = scmp.ne.s32.totalorder %s198, %s212
      %p214 = scmp.eq.s32.totalorder %s41, 0
      %p215 = por %p213, %p214
      %s217 = sadd.s32 %s216, 1
      %p220 = scmp.eq.s32.totalorder %s35, 1
      %p221 = scmp.ne.s32.totalorder %s216, %s218
      %p222 = scmp.eq.s32.totalorder %s35, 0
      %p223 = por %p221, %p222
      %p224 = scmp.ne.s32.totalorder %s216, %s218
      %p225 = scmp.eq.s32.totalorder %s40, 1
      %p226 = por %p224, %p225
      %p227 = scmp.ne.s32.totalorder %s218, %s219
      %p228 = scmp.eq.s32.totalorder %s40, 0
      %p229 = por %p227, %p228
      %p230 = scmp.ne.s32.totalorder %s218, %s219
      %p231 = scmp.eq.s32.totalorder %s41, 1
      %p232 = por %p230, %p231
      %p234 = scmp.ne.s32.totalorder %s219, %s233
      %p235 = scmp.eq.s32.totalorder %s41, 0
      %p236 = por %p234, %p235
      %s238 = sadd.s32 %s237, 1
      %p241 = scmp.eq.s32.totalorder %s35, 1
      %p242 = scmp.ne.s32.totalorder %s237, %s239
      %p243 = scmp.eq.s32.totalorder %s35, 0
      %p244 = por %p242, %p243
      %p245 = scmp.ne.s32.totalorder %s237, %s239
      %p246 = scmp.eq.s32.totalorder %s40, 1
      %p247 = por %p245, %p246
      %p248 = scmp.ne.s32.totalorder %s239, %s240
      %p249 = scmp.eq.s32.totalorder %s40, 0
      %p250 = por %p248, %p249
      %p251 = scmp.ne.s32.totalorder %s239, %s240
      %p252 = scmp.eq.s32.totalorder %s41, 1
      %p253 = por %p251, %p252
      %p255 = scmp.ne.s32.totalorder %s240, %s254
      %p256 = scmp.eq.s32.totalorder %s41, 0
      %p257 = por %p255, %p256
      %s259 = sadd.s32 %s258, 1
      %p262 = scmp.eq.s32.totalorder %s35, 1
      %p263 = scmp.ne.s32.totalorder %s258, %s260
      %p264 = scmp.eq.s32.totalorder %s35, 0
      %p265 = por %p263, %p264
      %p266 = scmp.ne.s32.totalorder %s258, %s260
      %p267 = scmp.eq.s32.totalorder %s40, 1
      %p268 = por %p266, %p267
      %p269 = scmp.ne.s32.totalorder %s260, %s261
      %p270 = scmp.eq.s32.totalorder %s40, 0
      %p271 = por %p269, %p270
      %p272 = scmp.ne.s32.totalorder %s260, %s261
      %p273 = scmp.eq.s32.totalorder %s41, 1
      %p274 = por %p272, %p273
      %p276 = scmp.ne.s32.totalorder %s261, %s275
      %p277 = scmp.eq.s32.totalorder %s41, 0
      %p278 = por %p276, %p277
      %s280 = sadd.s32 %s279, 1
      %p283 = scmp.eq.s32.totalorder %s35, 1
      %p284 = scmp.ne.s32.totalorder %s279, %s281
      %p285 = scmp.eq.s32.totalorder %s35, 0
      %p286 = por %p284, %p285
      %p287 = scmp.ne.s32.totalorder %s279, %s281
      %p288 = scmp.eq.s32.totalorder %s40, 1
      %p289 = por %p287, %p288
      %p290 = scmp.ne.s32.totalorder %s281, %s282
      %p291 = scmp.eq.s32.totalorder %s40, 0
      %p292 = por %p290, %p291
      %p293 = scmp.ne.s32.totalorder %s281, %s282
      %p294 = scmp.eq.s32.totalorder %s41, 1
      %p295 = por %p293, %p294
      %p297 = scmp.ne.s32.totalorder %s282, %s296
      %p298 = scmp.eq.s32.totalorder %s41, 0
      %p299 = por %p297, %p298
      %s301 = sadd.s32 %s300, 1
      %p304 = scmp.eq.s32.totalorder %s35, 1
      %p305 = scmp.ne.s32.totalorder %s300, %s302
      %p306 = scmp.eq.s32.totalorder %s35, 0
      %p307 = por %p305, %p306
      %p308 = scmp.ne.s32.totalorder %s300, %s302
      %p309 = scmp.eq.s32.totalorder %s40, 1
      %p310 = por %p308, %p309
      %p311 = scmp.ne.s32.totalorder %s302, %s303
      %p312 = scmp.eq.s32.totalorder %s40, 0
      %p313 = por %p311, %p312
      %p314 = scmp.ne.s32.totalorder %s302, %s303
      %p315 = scmp.eq.s32.totalorder %s41, 1
      %p316 = por %p314, %p315
      %p318 = scmp.ne.s32.totalorder %s303, %s317
      %p319 = scmp.eq.s32.totalorder %s41, 0
      %p320 = por %p318, %p319
      %s322 = sadd.s32 %s321, 1
      %p325 = scmp.eq.s32.totalorder %s35, 1
      %p326 = scmp.ne.s32.totalorder %s321, %s323
      %p327 = scmp.eq.s32.totalorder %s35, 0
      %p328 = por %p326, %p327
      %p329 = scmp.ne.s32.totalorder %s321, %s323
      %p330 = scmp.eq.s32.totalorder %s40, 1
      %p331 = por %p329, %p330
      %p332 = scmp.ne.s32.totalorder %s323, %s324
      %p333 = scmp.eq.s32.totalorder %s40, 0
      %p334 = por %p332, %p333
      %p335 = scmp.ne.s32.totalorder %s323, %s324
      %p336 = scmp.eq.s32.totalorder %s41, 1
      %p337 = por %p335, %p336
      %p339 = scmp.ne.s32.totalorder %s324, %s338
      %p340 = scmp.eq.s32.totalorder %s41, 0
      %p341 = por %p339, %p340
      %s343 = sadd.s32 %s342, 1
      %p346 = scmp.eq.s32.totalorder %s35, 1
      %p347 = scmp.ne.s32.totalorder %s342, %s344
      %p348 = scmp.eq.s32.totalorder %s35, 0
      %p349 = por %p347, %p348
      %p350 = scmp.ne.s32.totalorder %s342, %s344
      %p351 = scmp.eq.s32.totalorder %s40, 1
      %p352 = por %p350, %p351
      %p353 = scmp.ne.s32.totalorder %s344, %s345
      %p354 = scmp.eq.s32.totalorder %s40, 0
      %p355 = por %p353, %p354
      %p356 = scmp.ne.s32.totalorder %s344, %s345
      %p357 = scmp.eq.s32.totalorder %s41, 1
      %p358 = por %p356, %p357
      %p360 = scmp.ne.s32.totalorder %s345, %s359
      %p361 = scmp.eq.s32.totalorder %s41, 0
      %p362 = por %p360, %p361
      %s364 = sadd.s32 %s363, 1
      %p367 = scmp.eq.s32.totalorder %s35, 1
      %p368 = scmp.ne.s32.totalorder %s363, %s365
      %p369 = scmp.eq.s32.totalorder %s35, 0
      %p370 = por %p368, %p369
      %p371 = scmp.ne.s32.totalorder %s363, %s365
      %p372 = scmp.eq.s32.totalorder %s40, 1
      %p373 = por %p371, %p372
      %p374 = scmp.ne.s32.totalorder %s365, %s366
      %p375 = scmp.eq.s32.totalorder %s40, 0
      %p376 = por %p374, %p375
      %p377 = scmp.ne.s32.totalorder %s365, %s366
      %p378 = scmp.eq.s32.totalorder %s41, 1
      %p379 = por %p377, %p378
      %p381 = scmp.ne.s32.totalorder %s366, %s380
      %p382 = scmp.eq.s32.totalorder %s41, 0
      %p383 = por %p381, %p382
      %s385 = sadd.s32 %s384, 1
      %p388 = scmp.eq.s32.totalorder %s35, 1
      %p389 = scmp.ne.s32.totalorder %s384, %s386
      %p390 = scmp.eq.s32.totalorder %s35, 0
      %p391 = por %p389, %p390
      %p392 = scmp.ne.s32.totalorder %s384, %s386
      %p393 = scmp.eq.s32.totalorder %s40, 1
      %p394 = por %p392, %p393
      %p395 = scmp.ne.s32.totalorder %s386, %s387
      %p396 = scmp.eq.s32.totalorder %s40, 0
      %p397 = por %p395, %p396
      %p398 = scmp.ne.s32.totalorder %s386, %s387
      %p399 = scmp.eq.s32.totalorder %s41, 1
      %p400 = por %p398, %p399
      %p402 = scmp.ne.s32.totalorder %s387, %s401
      %p403 = scmp.eq.s32.totalorder %s41, 0
      %p404 = por %p402, %p403
      %s405 = ssub.s32 %s35, %s42
      %p406 = scmp.eq.s32.totalorder %s405, 0
      %s408 = sadd.s32 %s407, 1
      %s409 = scalar_select %p406, %s407, %s408
      %p412 = pneg %p406
      %p413 = scmp.eq.s32.totalorder %s35, 1
      %p414 = por %p412, %p413
      %p415 = scmp.ne.s32.totalorder %s407, %s410
      %p416 = scmp.eq.s32.totalorder %s35, 0
      %p417 = por %p415, %p416
      %p418 = scmp.ne.s32.totalorder %s407, %s410
      %p419 = scmp.eq.s32.totalorder %s40, 1
      %p420 = por %p418, %p419
      %p421 = scmp.ne.s32.totalorder %s410, %s411
      %p422 = scmp.eq.s32.totalorder %s40, 0
      %p423 = por %p421, %p422
      %p424 = scmp.ne.s32.totalorder %s410, %s411
      %p425 = scmp.eq.s32.totalorder %s41, 1
      %p426 = por %p424, %p425
      %p428 = scmp.ne.s32.totalorder %s411, %s427
      %p429 = scmp.eq.s32.totalorder %s41, 0
      %p430 = por %p428, %p429
      %s431 = ssub.s32 %s35, %s42
      %p432 = scmp.eq.s32.totalorder %s431, 0
      %s434 = sadd.s32 %s433, 1
      %s435 = scalar_select %p432, %s433, %s434
      %p438 = pneg %p432
      %p439 = scmp.eq.s32.totalorder %s35, 1
      %p440 = por %p438, %p439
      %p441 = scmp.ne.s32.totalorder %s433, %s436
      %p442 = scmp.eq.s32.totalorder %s35, 0
      %p443 = por %p441, %p442
      %p444 = scmp.ne.s32.totalorder %s433, %s436
      %p445 = scmp.eq.s32.totalorder %s40, 1
      %p446 = por %p444, %p445
      %p447 = scmp.ne.s32.totalorder %s436, %s437
      %p448 = scmp.eq.s32.totalorder %s40, 0
      %p449 = por %p447, %p448
      %p450 = scmp.ne.s32.totalorder %s436, %s437
      %p451 = scmp.eq.s32.totalorder %s41, 1
      %p452 = por %p450, %p451
      %p454 = scmp.ne.s32.totalorder %s437, %s453
      %p455 = scmp.eq.s32.totalorder %s41, 0
      %p456 = por %p454, %p455
      %p457 = scmp.le.s32.totalorder 1, %s35
      %p458 = scmp.lt.s32.totalorder %s35, 3
      %p459 = pnand %p457, %p458
      %p460 = pneg %p459
      // Predicated region
      $region9: #{tpu_custom_call.1} parent=5 // pred_check
        _
      $region10: #{tpu_custom_call.1} parent=5 // pred_check_branch
        %462 = sbr.rel (%p459) target = $region12
      $region11: #{tpu_custom_call.1} parent=5 // pred_region
        %s463 = ssub.s32 %s35, 1
        // Predicated region
        $region13: #{tpu_custom_call.1} parent=11 // pred_check
          %p464 = pneg %p82
        $region14: #{tpu_custom_call.1} parent=11 // pred_check_branch
          %466 = sbr.rel (%p464) target = $region16
        $region15: #{tpu_custom_call.1} parent=11 // pred_region
          _
        $region16: #{tpu_custom_call.1} parent=11 // pred_fallthru
          _
        // Predicated region
        $region17: #{tpu_custom_call.1} parent=11 // pred_check
          %p467 = pneg %p103
        $region18: #{tpu_custom_call.1} parent=11 // pred_check_branch
          %469 = sbr.rel (%p467) target = $region20
        $region19: #{tpu_custom_call.1} parent=11 // pred_region
          %s471 = ssub.s32 16, 16
          %472 = vsyncadd [#allocation3], %s471
          %s474 = sshll.u32 [#allocation2], 4
          %s475 = int_to_ptr.vmem [resolvable:$true] %s474
          %477 = dma.hbm_to_vmem [thread:$0]  %s2, 16, %s475, [#allocation3]
        $region20: #{tpu_custom_call.1} parent=11 // pred_fallthru
          _
        // Predicated region
        $region21: #{tpu_custom_call.1} parent=11 // pred_check
          %p478 = pneg %p124
        $region22: #{tpu_custom_call.1} parent=11 // pred_check_branch
          %480 = sbr.rel (%p478) target = $region24
        $region23: #{tpu_custom_call.1} parent=11 // pred_region
          _
        $region24: #{tpu_custom_call.1} parent=11 // pred_fallthru
          _
        // Predicated region
        $region25: #{tpu_custom_call.1} parent=11 // pred_check
          %p481 = pneg %p145
        $region26: #{tpu_custom_call.1} parent=11 // pred_check_branch
          %483 = sbr.rel (%p481) target = $region28
        $region27: #{tpu_custom_call.1} parent=11 // pred_region
          %s485 = ssub.s32 16, 16
          %486 = vsyncadd [#allocation6], %s485
          %s488 = sshll.u32 [#allocation5], 4
          %s489 = int_to_ptr.vmem [resolvable:$true] %s488
          %491 = dma.hbm_to_vmem [thread:$0]  %s4, 16, %s489, [#allocation6]
        $region28: #{tpu_custom_call.1} parent=11 // pred_fallthru
          _
        // Predicated region
        $region29: #{tpu_custom_call.1} parent=11 // pred_check
          %p492 = pneg %p166
        $region30: #{tpu_custom_call.1} parent=11 // pred_check_branch
          %494 = sbr.rel (%p492) target = $region32
        $region31: #{tpu_custom_call.1} parent=11 // pred_region
          %s496 = ssub.s32 16, 16
          %497 = vsyncadd [#allocation6], %s496
          %s499 = sshll.u32 [#allocation7], 4
          %s500 = int_to_ptr.vmem [resolvable:$true] %s499
          %502 = dma.hbm_to_vmem [thread:$0]  %s5, 16, %s500, [#allocation6]
        $region32: #{tpu_custom_call.1} parent=11 // pred_fallthru
          _
        // Predicated region
        $region33: #{tpu_custom_call.1} parent=11 // pred_check
          %p503 = pneg %p187
        $region34: #{tpu_custom_call.1} parent=11 // pred_check_branch
          %505 = sbr.rel (%p503) target = $region36
        $region35: #{tpu_custom_call.1} parent=11 // pred_region
          %s507 = ssub.s32 16, 16
          %508 = vsyncadd [#allocation9], %s507
          %s510 = sshll.u32 [#allocation8], 4
          %s511 = int_to_ptr.vmem [resolvable:$true] %s510
          %513 = dma.hbm_to_vmem [thread:$0]  %s6, 16, %s511, [#allocation9]
        $region36: #{tpu_custom_call.1} parent=11 // pred_fallthru
          _
        // Predicated region
        $region37: #{tpu_custom_call.1} parent=11 // pred_check
          %p514 = pneg %p208
        $region38: #{tpu_custom_call.1} parent=11 // pred_check_branch
          %516 = sbr.rel (%p514) target = $region40
        $region39: #{tpu_custom_call.1} parent=11 // pred_region
          %s518 = ssub.s32 16, 16
          %519 = vsyncadd [#allocation9], %s518
          %s521 = sshll.u32 [#allocation10], 4
          %s522 = int_to_ptr.vmem [resolvable:$true] %s521
          %524 = dma.hbm_to_vmem [thread:$0]  %s7, 16, %s522, [#allocation9]
        $region40: #{tpu_custom_call.1} parent=11 // pred_fallthru
          _
        // Predicated region
        $region41: #{tpu_custom_call.1} parent=11 // pred_check
          %p525 = pneg %p229
        $region42: #{tpu_custom_call.1} parent=11 // pred_check_branch
          %527 = sbr.rel (%p525) target = $region44
        $region43: #{tpu_custom_call.1} parent=11 // pred_region
          %s529 = ssub.s32 16, 16
          %530 = vsyncadd [#allocation12], %s529
          %s532 = sshll.u32 [#allocation11], 4
          %s533 = int_to_ptr.vmem [resolvable:$true] %s532
          %535 = dma.hbm_to_vmem [thread:$0]  %s8, 16, %s533, [#allocation12]
        $region44: #{tpu_custom_call.1} parent=11 // pred_fallthru
          _
        // Predicated region
        $region45: #{tpu_custom_call.1} parent=11 // pred_check
          %p536 = pneg %p250
        $region46: #{tpu_custom_call.1} parent=11 // pred_check_branch
          %538 = sbr.rel (%p536) target = $region48
        $region47: #{tpu_custom_call.1} parent=11 // pred_region
          _
        $region48: #{tpu_custom_call.1} parent=11 // pred_fallthru
          _
        // Predicated region
        $region49: #{tpu_custom_call.1} parent=11 // pred_check
          %p539 = pneg %p271
        $region50: #{tpu_custom_call.1} parent=11 // pred_check_branch
          %541 = sbr.rel (%p539) target = $region52
        $region51: #{tpu_custom_call.1} parent=11 // pred_region
          _
        $region52: #{tpu_custom_call.1} parent=11 // pred_fallthru
          _
        // Predicated region
        $region53: #{tpu_custom_call.1} parent=11 // pred_check
          %p542 = pneg %p292
        $region54: #{tpu_custom_call.1} parent=11 // pred_check_branch
          %544 = sbr.rel (%p542) target = $region56
        $region55: #{tpu_custom_call.1} parent=11 // pred_region
          _
        $region56: #{tpu_custom_call.1} parent=11 // pred_fallthru
          _
        // Predicated region
        $region57: #{tpu_custom_call.1} parent=11 // pred_check
          %p545 = pneg %p313
        $region58: #{tpu_custom_call.1} parent=11 // pred_check_branch
          %547 = sbr.rel (%p545) target = $region60
        $region59: #{tpu_custom_call.1} parent=11 // pred_region
          _
        $region60: #{tpu_custom_call.1} parent=11 // pred_fallthru
          _
        // Predicated region
        $region61: #{tpu_custom_call.1} parent=11 // pred_check
          %p548 = pneg %p334
        $region62: #{tpu_custom_call.1} parent=11 // pred_check_branch
          %550 = sbr.rel (%p548) target = $region64
        $region63: #{tpu_custom_call.1} parent=11 // pred_region
          _
        $region64: #{tpu_custom_call.1} parent=11 // pred_fallthru
          _
        // Predicated region
        $region65: #{tpu_custom_call.1} parent=11 // pred_check
          %p551 = pneg %p355
        $region66: #{tpu_custom_call.1} parent=11 // pred_check_branch
          %553 = sbr.rel (%p551) target = $region68
        $region67: #{tpu_custom_call.1} parent=11 // pred_region
          _
        $region68: #{tpu_custom_call.1} parent=11 // pred_fallthru
          _
        // Predicated region
        $region69: #{tpu_custom_call.1} parent=11 // pred_check
          %p554 = pneg %p376
        $region70: #{tpu_custom_call.1} parent=11 // pred_check_branch
          %556 = sbr.rel (%p554) target = $region72
        $region71: #{tpu_custom_call.1} parent=11 // pred_region
          _
        $region72: #{tpu_custom_call.1} parent=11 // pred_fallthru
          _
        // Predicated region
        $region73: #{tpu_custom_call.1} parent=11 // pred_check
          %p557 = pneg %p397
        $region74: #{tpu_custom_call.1} parent=11 // pred_check_branch
          %559 = sbr.rel (%p557) target = $region76
        $region75: #{tpu_custom_call.1} parent=11 // pred_region
          _
        $region76: #{tpu_custom_call.1} parent=11 // pred_fallthru
          _
      $region12: #{tpu_custom_call.1} parent=5 // pred_fallthru
        _
      %p560 = scmp.lt.s32.totalorder %s35, 2
      // Predicated region
      $region77: #{tpu_custom_call.1} parent=5 // pred_check
        %p561 = pneg %p560
      $region78: #{tpu_custom_call.1} parent=5 // pred_check_branch
        %563 = sbr.rel (%p561) target = $region80
      $region79: #{tpu_custom_call.1} parent=5 // pred_region
        // Predicated region
        $region81: #{tpu_custom_call.1} parent=79 // pred_check
          %p564 = pneg %p55
        $region82: #{tpu_custom_call.1} parent=79 // pred_check_branch
          %566 = sbr.rel (%p564) target = $region84
        $region83: #{tpu_custom_call.1} parent=79 // pred_region
          %p567 = scmp.lt.s32.totalorder %s35, 1
          %s568 = scalar_select %p567, %s35, 1
          %s569 = smul.addr %s568, 8
          %s570 = scalar_lea.vmem %s0, %s569
        $region84: #{tpu_custom_call.1} parent=79 // pred_fallthru
          _
      $region80: #{tpu_custom_call.1} parent=5 // pred_fallthru
        _
      %p571 = scmp.le.s32.totalorder 1, %s35
      %p572 = scmp.lt.s32.totalorder %s35, 3
      %p573 = pnand %p571, %p572
      %p574 = pneg %p573
      // Predicated region
      $region85: #{tpu_custom_call.1} parent=5 // pred_check
        _
      $region86: #{tpu_custom_call.1} parent=5 // pred_check_branch
        %576 = sbr.rel (%p573) target = $region88
      $region87: #{tpu_custom_call.1} parent=5 // pred_region
        %s577 = ssub.s32 %s35, 1
        // Predicated region
        $region89: #{tpu_custom_call.1} parent=87 // pred_check
          %p578 = pneg %p103
        $region90: #{tpu_custom_call.1} parent=87 // pred_check_branch
          %580 = sbr.rel (%p578) target = $region92
        $region91: #{tpu_custom_call.1} parent=87 // pred_region
          %581 = dma.done [#allocation3], 16
        $region92: #{tpu_custom_call.1} parent=87 // pred_fallthru
          _
        // Predicated region
        $region93: #{tpu_custom_call.1} parent=87 // pred_check
          %p582 = pneg %p145
        $region94: #{tpu_custom_call.1} parent=87 // pred_check_branch
          %584 = sbr.rel (%p582) target = $region96
        $region95: #{tpu_custom_call.1} parent=87 // pred_region
          %585 = dma.done [#allocation6], 16
        $region96: #{tpu_custom_call.1} parent=87 // pred_fallthru
          _
        // Predicated region
        $region97: #{tpu_custom_call.1} parent=87 // pred_check
          %p586 = pneg %p166
        $region98: #{tpu_custom_call.1} parent=87 // pred_check_branch
          %588 = sbr.rel (%p586) target = $region100
        $region99: #{tpu_custom_call.1} parent=87 // pred_region
          %589 = dma.done [#allocation6], 16
        $region100: #{tpu_custom_call.1} parent=87 // pred_fallthru
          _
        // Predicated region
        $region101: #{tpu_custom_call.1} parent=87 // pred_check
          %p590 = pneg %p187
        $region102: #{tpu_custom_call.1} parent=87 // pred_check_branch
          %592 = sbr.rel (%p590) target = $region104
        $region103: #{tpu_custom_call.1} parent=87 // pred_region
          %593 = dma.done [#allocation9], 16
        $region104: #{tpu_custom_call.1} parent=87 // pred_fallthru
          _
        // Predicated region
        $region105: #{tpu_custom_call.1} parent=87 // pred_check
          %p594 = pneg %p208
        $region106: #{tpu_custom_call.1} parent=87 // pred_check_branch
          %596 = sbr.rel (%p594) target = $region108
        $region107: #{tpu_custom_call.1} parent=87 // pred_region
          %597 = dma.done [#allocation9], 16
        $region108: #{tpu_custom_call.1} parent=87 // pred_fallthru
          _
        // Predicated region
        $region109: #{tpu_custom_call.1} parent=87 // pred_check
          %p598 = pneg %p229
        $region110: #{tpu_custom_call.1} parent=87 // pred_check_branch
          %600 = sbr.rel (%p598) target = $region112
        $region111: #{tpu_custom_call.1} parent=87 // pred_region
          %601 = dma.done [#allocation12], 16
        $region112: #{tpu_custom_call.1} parent=87 // pred_fallthru
          _
        %p602 = scmp.lt.s32.totalorder %s40, 1
        %s603 = scalar_select %p602, %s40, 1
        %s604 = smul.addr %s603, 8
        %s605 = scalar_lea.vmem %s0, %s604
        %p606 = pneg %p61
        %p607 = pneg %p58
        %p608 = pneg %p82
        %p609 = pneg %p79
        %p610 = pneg %p103
        %p611 = pneg %p100
        %p612 = pneg %p124
        %p613 = pneg %p121
        %p614 = pneg %p145
        %p615 = pneg %p142
        %p616 = pneg %p166
        %p617 = pneg %p163
        %p618 = pneg %p187
        %p619 = pneg %p184
        %p620 = pneg %p208
        %p621 = pneg %p205
        %p622 = pneg %p229
        %p623 = pneg %p226
        %p624 = pneg %p250
        %p625 = pneg %p247
        %p626 = pneg %p271
        %p627 = pneg %p268
        %p628 = pneg %p292
        %p629 = pneg %p289
        %p630 = pneg %p313
        %p631 = pneg %p310
        %p632 = pneg %p334
        %p633 = pneg %p331
        %p634 = pneg %p355
        %p635 = pneg %p352
        %p636 = pneg %p376
        %p637 = pneg %p373
        %p638 = pneg %p397
        %p639 = pneg %p394
        %p640 = pneg %p423
        %p641 = pneg %p420
        %s642 = sand.u32 %s410, 1
        %s643 = scalar_lea.sflag [#allocation4], %s642
        %s644 = sand.u32 %s410, 1
        %s645 = smul.addr %s644, 8
        %s646 = scalar_lea.vmem [#allocation13], %s645
        %p647 = pneg %p449
        %p648 = pneg %p446
        %s649 = sand.u32 %s436, 1
        %s650 = scalar_lea.sflag [#allocation15], %s649
        %s651 = sand.u32 %s436, 1
        %s652 = smul.addr %s651, 8
        %s653 = scalar_lea.vmem [#allocation14], %s652
        %p654 = scmp.lt.s32.totalorder %s40, 1
        %s655 = scalar_select %p654, %s40, 1
        %s656 = smul.addr %s655, 8
        %s657 = scalar_lea.vmem %s0, %s656
        %v659 = vld [vmem:[%s657] sm:$0xff]
        %v660 = vld [vmem:[#allocation7] sm:$0x1]
        %v661 = vld [vmem:[#allocation8] sm:$0x1]
        %vm662 = vcmask 261120
        %v663 = vsel %vm662, %v659, 0.0
        %664 = vadd.xlane.f32.xlu0 %v663
        %v665 = vpop.xlane.xlu0 %664
        %v666 = vrcp.pop 32.0
        %v667 = vmul.f32 %v665, %v666
        %v668 = vsub.f32 %v659, %v667
        %v669 = vmul.f32 %v668, %v668
        %v670 = vsel %vm662, %v669, 0.0
        %671 = vadd.xlane.f32.xlu0 %v670
        %v672 = vpop.xlane.xlu0 %671
        %v673 = vmul.f32 %v672, %v666
        %v674 = vadd.f32 %v673, 1e-05
        %v675 = vrsqrt.pop %v674
        %v676 = vmul.f32 %v668, %v675
        %v678 = vlaneseq
        %v679 = vshrl.u32 %v678, 7
        %v680 = vsub.s32 0, %v679
        %v681 = vrot.slane %v660, %v680
        %v683 = vmul.f32 %v676, %v681
        %v685 = vlaneseq
        %v686 = vshrl.u32 %v685, 7
        %v687 = vsub.s32 0, %v686
        %v688 = vrot.slane %v661, %v687
        %v690 = vadd.f32 %v683, %v688
        %v691 = vpack.c.bf16 %v690, %v690
        %v692 = vld [vmem:[%s1] sm:$0xf]
        %v693 = vld [vmem:[%s1 + $0x4] sm:$0xf]
        %v694 = vld [vmem:[%s1 + $0x8] sm:$0xf]
        %v695 = vld [vmem:[%s1 + $0xc] sm:$0xf]
        %v696 = vld [vmem:[#allocation2] sm:$0x1]
        %v698 = vlaneseq
        %v699 = vshrl.u32 %v698, 7
        %v700 = vsub.s32 0, %v699
        %v701 = vrot.slane %v696, %v700
        %v707 = vunpack.c.l.b16 %v692
        %v708 = vunpack.c.l.b16 %v693
        %v709 = vunpack.c.l.b16 %v694
        %v710 = vunpack.c.l.b16 %v695
        %v711 = vpack.c.b16 %v708, %v707
        %v712 = vpack.c.b16 %v710, %v709
        %v716 = vsel %vm662, %v691, 0
        %718 = vmatprep.subr.bf16.mxu0 0
        %719 = vmatpush1.bf16.msra.mxu0 0
        %720 = vmatprep.subr.bf16.mxu0 0
        %721 = vmatpush1.bf16.msra.mxu0 0
        %722 = vmatprep.subr.bf16.mxu0 0
        %723 = vmatpush1.bf16.msra.mxu0 0
        %724 = vmatprep.subr.bf16.mxu0 0
        %725 = vmatpush1.bf16.msra.mxu0 0
        %726 = vmatprep.subr.bf16.mxu0 0
        %727 = vmatpush1.bf16.msra.mxu0 0
        %728 = vmatprep.subr.bf16.mxu0 0
        %729 = vmatpush1.bf16.msra.mxu0 0
        %730 = vmatprep.subr.bf16.mxu0 0
        %731 = vmatpush1.bf16.msra.mxu0 %v712
        %732 = vmatprep.subr.bf16.mxu0 0
        %733 = vmatpush1.bf16.msra.mxu0 %v711
        %734 = vmatprep.subr.bf16.mxu0 0
        %735 = vmatpush2.bf16.msra.mxu0 0
        %736 = vmatprep.subr.bf16.mxu0 0
        %737 = vmatpush2.bf16.msra.mxu0 0
        %738 = vmatprep.subr.bf16.mxu0 0
        %739 = vmatpush2.bf16.msra.mxu0 0
        %740 = vmatprep.subr.bf16.mxu0 0
        %741 = vmatpush2.bf16.msra.mxu0 0
        %742 = vmatprep.subr.bf16.mxu0 0
        %743 = vmatpush2.bf16.msra.mxu0 0
        %744 = vmatprep.subr.bf16.mxu0 0
        %745 = vmatpush2.bf16.msra.mxu0 0
        %746 = vmatprep.subr.bf16.mxu0 0
        %747 = vmatpush2.bf16.msra.mxu0 0
        %748 = vmatprep.subr.bf16.mxu0 0
        %749 = vmatpush2.bf16.msra.mxu0 0
        %750 = vmatprep.mubr.bf16.mxu0 0
        %751 = vmatmul.mubr.bf16.gmra.mxu0 %v716
        %v752 = vpop.f32.mrf.mxu0
        %v753 = vadd.f32 %v701, %v752
        %v754 = vpop.f32.mrf.mxu0
        %v755 = vpop.f32.mrf.mxu0
        %v756 = vpop.f32.mrf.mxu0
        %757 = vdwg.mxu0
        %759 = vrot.lane.b32.xlu0 %v753, 104
        %v760 = vpop.permute.xlu0 %759
        %762 = vrot.lane.b32.xlu0 %v753, 80
        %v763 = vpop.permute.xlu0 %762
        %765 = vrot.lane.b32.xlu0 %v753, 56
        %v766 = vpop.permute.xlu0 %765
        %v768 = vmul.f32 %v753, 0.35355338
        %v769 = vmul.f32 %v760, 0.35355338
        %v770 = vmul.f32 %v763, 0.35355338
        %v771 = vmul.f32 %v766, 0.35355338
        %v772 = vpack.c.bf16 %v768, %v768
        %v773 = vpack.c.bf16 %v769, %v769
        %v774 = vpack.c.bf16 %v770, %v770
        %v775 = vpack.c.bf16 %v771, %v771
        %v776 = vpack.c.bf16 %v753, %v753
        %v777 = vpack.c.bf16 %v760, %v760
        %v778 = vpack.c.bf16 %v763, %v763
        %v779 = vpack.c.bf16 %v766, %v766
        %781 = vrot.lane.b32.xlu0 %v776, 120
        %v782 = vpop.permute.xlu0 %781
        %vm783 = vcmask 64512
        %v785 = vsel %vm783, %v772, 0
        %v788 = vsel %vm783, %v782, 0
        %790 = vmatprep.subr.bf16.mxu0 0
        %791 = vmatpush1.bf16.xpose.msra.mxu0 0
        %792 = vmatprep.subr.bf16.mxu0 0
        %793 = vmatpush1.bf16.xpose.msra.mxu0 0
        %794 = vmatprep.subr.bf16.mxu0 0
        %795 = vmatpush1.bf16.xpose.msra.mxu0 0
        %796 = vmatprep.subr.bf16.mxu0 0
        %797 = vmatpush1.bf16.xpose.msra.mxu0 0
        %798 = vmatprep.subr.bf16.mxu0 0
        %799 = vmatpush1.bf16.xpose.msra.mxu0 0
        %800 = vmatprep.subr.bf16.mxu0 0
        %801 = vmatpush1.bf16.xpose.msra.mxu0 0
        %802 = vmatprep.subr.bf16.mxu0 0
        %803 = vmatpush1.bf16.xpose.msra.mxu0 0
        %804 = vmatprep.subr.bf16.mxu0 0
        %805 = vmatpush1.bf16.xpose.msra.mxu0 %v788
        %806 = vmatprep.subr.bf16.mxu0 0
        %807 = vmatpush2.bf16.xpose.msra.mxu0 0
        %808 = vmatprep.subr.bf16.mxu0 0
        %809 = vmatpush2.bf16.xpose.msra.mxu0 0
        %810 = vmatprep.subr.bf16.mxu0 0
        %811 = vmatpush2.bf16.xpose.msra.mxu0 0
        %812 = vmatprep.subr.bf16.mxu0 0
        %813 = vmatpush2.bf16.xpose.msra.mxu0 0
        %814 = vmatprep.subr.bf16.mxu0 0
        %815 = vmatpush2.bf16.xpose.msra.mxu0 0
        %816 = vmatprep.subr.bf16.mxu0 0
        %817 = vmatpush2.bf16.xpose.msra.mxu0 0
        %818 = vmatprep.subr.bf16.mxu0 0
        %819 = vmatpush2.bf16.xpose.msra.mxu0 0
        %820 = vmatprep.subr.bf16.mxu0 0
        %821 = vmatpush2.bf16.xpose.msra.mxu0 0
        %822 = vmatprep.mubr.bf16.mxu0 0
        %823 = vmatmul.mubr.bf16.gmra.mxu0 %v785
        %v824 = vpop.f32.mrf.mxu0
        %v825 = vadd.f32 0.0, %v824
        %v826 = vpop.f32.mrf.mxu0
        %v827 = vpop.f32.mrf.mxu0
        %v828 = vpop.f32.mrf.mxu0
        %829 = vdwg.mxu0
        %831 = vrot.lane.b32.xlu0 %v777, 120
        %v832 = vpop.permute.xlu0 %831
        %v834 = vsel %vm783, %v773, 0
        %v837 = vsel %vm783, %v832, 0
        %839 = vmatprep.subr.bf16.mxu0 0
        %840 = vmatpush1.bf16.xpose.msra.mxu0 0
        %841 = vmatprep.subr.bf16.mxu0 0
        %842 = vmatpush1.bf16.xpose.msra.mxu0 0
        %843 = vmatprep.subr.bf16.mxu0 0
        %844 = vmatpush1.bf16.xpose.msra.mxu0 0
        %845 = vmatprep.subr.bf16.mxu0 0
        %846 = vmatpush1.bf16.xpose.msra.mxu0 0
        %847 = vmatprep.subr.bf16.mxu0 0
        %848 = vmatpush1.bf16.xpose.msra.mxu0 0
        %849 = vmatprep.subr.bf16.mxu0 0
        %850 = vmatpush1.bf16.xpose.msra.mxu0 0
        %851 = vmatprep.subr.bf16.mxu0 0
        %852 = vmatpush1.bf16.xpose.msra.mxu0 0
        %853 = vmatprep.subr.bf16.mxu0 0
        %854 = vmatpush1.bf16.xpose.msra.mxu0 %v837
        %855 = vmatprep.subr.bf16.mxu0 0
        %856 = vmatpush2.bf16.xpose.msra.mxu0 0
        %857 = vmatprep.subr.bf16.mxu0 0
        %858 = vmatpush2.bf16.xpose.msra.mxu0 0
        %859 = vmatprep.subr.bf16.mxu0 0
        %860 = vmatpush2.bf16.xpose.msra.mxu0 0
        %861 = vmatprep.subr.bf16.mxu0 0
        %862 = vmatpush2.bf16.xpose.msra.mxu0 0
        %863 = vmatprep.subr.bf16.mxu0 0
        %864 = vmatpush2.bf16.xpose.msra.mxu0 0
        %865 = vmatprep.subr.bf16.mxu0 0
        %866 = vmatpush2.bf16.xpose.msra.mxu0 0
        %867 = vmatprep.subr.bf16.mxu0 0
        %868 = vmatpush2.bf16.xpose.msra.mxu0 0
        %869 = vmatprep.subr.bf16.mxu0 0
        %870 = vmatpush2.bf16.xpose.msra.mxu0 0
        %871 = vmatprep.mubr.bf16.mxu0 0
        %872 = vmatmul.mubr.bf16.gmra.mxu0 %v834
        %v873 = vpop.f32.mrf.mxu0
        %v874 = vadd.f32 0.0, %v873
        %v875 = vpop.f32.mrf.mxu0
        %v876 = vpop.f32.mrf.mxu0
        %v877 = vpop.f32.mrf.mxu0
        %878 = vdwg.mxu0
        %880 = vrot.lane.b32.xlu0 %v778, 120
        %v881 = vpop.permute.xlu0 %880
        %v883 = vsel %vm783, %v774, 0
        %v886 = vsel %vm783, %v881, 0
        %888 = vmatprep.subr.bf16.mxu0 0
        %889 = vmatpush1.bf16.xpose.msra.mxu0 0
        %890 = vmatprep.subr.bf16.mxu0 0
        %891 = vmatpush1.bf16.xpose.msra.mxu0 0
        %892 = vmatprep.subr.bf16.mxu0 0
        %893 = vmatpush1.bf16.xpose.msra.mxu0 0
        %894 = vmatprep.subr.bf16.mxu0 0
        %895 = vmatpush1.bf16.xpose.msra.mxu0 0
        %896 = vmatprep.subr.bf16.mxu0 0
        %897 = vmatpush1.bf16.xpose.msra.mxu0 0
        %898 = vmatprep.subr.bf16.mxu0 0
        %899 = vmatpush1.bf16.xpose.msra.mxu0 0
        %900 = vmatprep.subr.bf16.mxu0 0
        %901 = vmatpush1.bf16.xpose.msra.mxu0 0
        %902 = vmatprep.subr.bf16.mxu0 0
        %903 = vmatpush1.bf16.xpose.msra.mxu0 %v886
        %904 = vmatprep.subr.bf16.mxu0 0
        %905 = vmatpush2.bf16.xpose.msra.mxu0 0
        %906 = vmatprep.subr.bf16.mxu0 0
        %907 = vmatpush2.bf16.xpose.msra.mxu0 0
        %908 = vmatprep.subr.bf16.mxu0 0
        %909 = vmatpush2.bf16.xpose.msra.mxu0 0
        %910 = vmatprep.subr.bf16.mxu0 0
        %911 = vmatpush2.bf16.xpose.msra.mxu0 0
        %912 = vmatprep.subr.bf16.mxu0 0
        %913 = vmatpush2.bf16.xpose.msra.mxu0 0
        %914 = vmatprep.subr.bf16.mxu0 0
        %915 = vmatpush2.bf16.xpose.msra.mxu0 0
        %916 = vmatprep.subr.bf16.mxu0 0
        %917 = vmatpush2.bf16.xpose.msra.mxu0 0
        %918 = vmatprep.subr.bf16.mxu0 0
        %919 = vmatpush2.bf16.xpose.msra.mxu0 0
        %920 = vmatprep.mubr.bf16.mxu0 0
        %921 = vmatmul.mubr.bf16.gmra.mxu0 %v883
        %v922 = vpop.f32.mrf.mxu0
        %v923 = vadd.f32 0.0, %v922
        %v924 = vpop.f32.mrf.mxu0
        %v925 = vpop.f32.mrf.mxu0
        %v926 = vpop.f32.mrf.mxu0
        %927 = vdwg.mxu0
        %929 = vrot.lane.b32.xlu0 %v779, 120
        %v930 = vpop.permute.xlu0 %929
        %v932 = vsel %vm783, %v775, 0
        %v935 = vsel %vm783, %v930, 0
        %937 = vmatprep.subr.bf16.mxu0 0
        %938 = vmatpush1.bf16.xpose.msra.mxu0 0
        %939 = vmatprep.subr.bf16.mxu0 0
        %940 = vmatpush1.bf16.xpose.msra.mxu0 0
        %941 = vmatprep.subr.bf16.mxu0 0
        %942 = vmatpush1.bf16.xpose.msra.mxu0 0
        %943 = vmatprep.subr.bf16.mxu0 0
        %944 = vmatpush1.bf16.xpose.msra.mxu0 0
        %945 = vmatprep.subr.bf16.mxu0 0
        %946 = vmatpush1.bf16.xpose.msra.mxu0 0
        %947 = vmatprep.subr.bf16.mxu0 0
        %948 = vmatpush1.bf16.xpose.msra.mxu0 0
        %949 = vmatprep.subr.bf16.mxu0 0
        %950 = vmatpush1.bf16.xpose.msra.mxu0 0
        %951 = vmatprep.subr.bf16.mxu0 0
        %952 = vmatpush1.bf16.xpose.msra.mxu0 %v935
        %953 = vmatprep.subr.bf16.mxu0 0
        %954 = vmatpush2.bf16.xpose.msra.mxu0 0
        %955 = vmatprep.subr.bf16.mxu0 0
        %956 = vmatpush2.bf16.xpose.msra.mxu0 0
        %957 = vmatprep.subr.bf16.mxu0 0
        %958 = vmatpush2.bf16.xpose.msra.mxu0 0
        %959 = vmatprep.subr.bf16.mxu0 0
        %960 = vmatpush2.bf16.xpose.msra.mxu0 0
        %961 = vmatprep.subr.bf16.mxu0 0
        %962 = vmatpush2.bf16.xpose.msra.mxu0 0
        %963 = vmatprep.subr.bf16.mxu0 0
        %964 = vmatpush2.bf16.xpose.msra.mxu0 0
        %965 = vmatprep.subr.bf16.mxu0 0
        %966 = vmatpush2.bf16.xpose.msra.mxu0 0
        %967 = vmatprep.subr.bf16.mxu0 0
        %968 = vmatpush2.bf16.xpose.msra.mxu0 0
        %969 = vmatprep.mubr.bf16.mxu0 0
        %970 = vmatmul.mubr.bf16.gmra.mxu0 %v932
        %v971 = vpop.f32.mrf.mxu0
        %v972 = vadd.f32 0.0, %v971
        %v973 = vpop.f32.mrf.mxu0
        %v974 = vpop.f32.mrf.mxu0
        %v975 = vpop.f32.mrf.mxu0
        %976 = vdwg.mxu0
        %v977 = vsel %vm783, %v825, -inf
        %978 = vmax.xlane.f32.xlu0 %v977
        %v979 = vpop.xlane.xlu0 %978
        %v980 = vsel %vm783, %v874, -inf
        %981 = vmax.xlane.f32.xlu0 %v980
        %v982 = vpop.xlane.xlu0 %981
        %v983 = vsel %vm783, %v923, -inf
        %984 = vmax.xlane.f32.xlu0 %v983
        %v985 = vpop.xlane.xlu0 %984
        %v986 = vsel %vm783, %v972, -inf
        %987 = vmax.xlane.f32.xlu0 %v986
        %v988 = vpop.xlane.xlu0 %987
        %v989 = vsub.f32 %v825, %v979
        %v990 = vsub.f32 %v874, %v982
        %v991 = vsub.f32 %v923, %v985
        %v992 = vsub.f32 %v972, %v988
        %v993 = vmul.f32 %v989, 1.442695
        %v994 = vpow.pop %v993
        %v995 = vmul.f32 %v990, 1.442695
        %v996 = vpow.pop %v995
        %v997 = vmul.f32 %v991, 1.442695
        %v998 = vpow.pop %v997
        %v999 = vmul.f32 %v992, 1.442695
        %v1000 = vpow.pop %v999
        %v1001 = vsel %vm783, %v994, 0.0
        %1002 = vadd.xlane.f32.xlu0 %v1001
        %v1003 = vpop.xlane.xlu0 %1002
        %v1004 = vsel %vm783, %v996, 0.0
        %1005 = vadd.xlane.f32.xlu0 %v1004
        %v1006 = vpop.xlane.xlu0 %1005
        %v1007 = vsel %vm783, %v998, 0.0
        %1008 = vadd.xlane.f32.xlu0 %v1007
        %v1009 = vpop.xlane.xlu0 %1008
        %v1010 = vsel %vm783, %v1000, 0.0
        %1011 = vadd.xlane.f32.xlu0 %v1010
        %v1012 = vpop.xlane.xlu0 %1011
        %v1013 = vrcp.pop %v1003
        %v1014 = vrcp.pop %v1006
        %v1015 = vrcp.pop %v1009
        %v1016 = vrcp.pop %v1012
        %v1017 = vmul.f32 %v994, %v1013
        %v1018 = vmul.f32 %v996, %v1014
        %v1019 = vmul.f32 %v998, %v1015
        %v1020 = vmul.f32 %v1000, %v1016
        %v1021 = vpack.c.bf16 %v1017, %v1017
        %v1022 = vpack.c.bf16 %v1018, %v1018
        %v1023 = vpack.c.bf16 %v1019, %v1019
        %v1024 = vpack.c.bf16 %v1020, %v1020
        %1025 = vrot.lane.b32.xlu0 %v776, 112
        %v1026 = vpop.permute.xlu0 %1025
        %v1028 = vsel %vm783, %v1021, 0
        %vm1030 = vcmask 1043456
        %v1032 = vsel %vm1030, %v1026, 0
        %1034 = vmatprep.subr.bf16.mxu0 0
        %1035 = vmatpush1.bf16.msra.mxu0 0
        %1036 = vmatprep.subr.bf16.mxu0 0
        %1037 = vmatpush1.bf16.msra.mxu0 0
        %1038 = vmatprep.subr.bf16.mxu0 0
        %1039 = vmatpush1.bf16.msra.mxu0 0
        %1040 = vmatprep.subr.bf16.mxu0 0
        %1041 = vmatpush1.bf16.msra.mxu0 0
        %1042 = vmatprep.subr.bf16.mxu0 0
        %1043 = vmatpush1.bf16.msra.mxu0 0
        %1044 = vmatprep.subr.bf16.mxu0 0
        %1045 = vmatpush1.bf16.msra.mxu0 0
        %1046 = vmatprep.subr.bf16.mxu0 0
        %1047 = vmatpush1.bf16.msra.mxu0 0
        %1048 = vmatprep.subr.bf16.mxu0 0
        %1049 = vmatpush1.bf16.msra.mxu0 %v1032
        %1050 = vmatprep.subr.bf16.mxu0 0
        %1051 = vmatpush2.bf16.msra.mxu0 0
        %1052 = vmatprep.subr.bf16.mxu0 0
        %1053 = vmatpush2.bf16.msra.mxu0 0
        %1054 = vmatprep.subr.bf16.mxu0 0
        %1055 = vmatpush2.bf16.msra.mxu0 0
        %1056 = vmatprep.subr.bf16.mxu0 0
        %1057 = vmatpush2.bf16.msra.mxu0 0
        %1058 = vmatprep.subr.bf16.mxu0 0
        %1059 = vmatpush2.bf16.msra.mxu0 0
        %1060 = vmatprep.subr.bf16.mxu0 0
        %1061 = vmatpush2.bf16.msra.mxu0 0
        %1062 = vmatprep.subr.bf16.mxu0 0
        %1063 = vmatpush2.bf16.msra.mxu0 0
        %1064 = vmatprep.subr.bf16.mxu0 0
        %1065 = vmatpush2.bf16.msra.mxu0 0
        %1066 = vmatprep.mubr.bf16.mxu0 0
        %1067 = vmatmul.mubr.bf16.gmra.mxu0 %v1028
        %v1068 = vpop.f32.mrf.mxu0
        %v1069 = vadd.f32 0.0, %v1068
        %v1070 = vpop.f32.mrf.mxu0
        %v1071 = vpop.f32.mrf.mxu0
        %v1072 = vpop.f32.mrf.mxu0
        %1073 = vdwg.mxu0
        %1074 = vrot.lane.b32.xlu0 %v777, 112
        %v1075 = vpop.permute.xlu0 %1074
        %v1077 = vsel %vm783, %v1022, 0
        %v1080 = vsel %vm1030, %v1075, 0
        %1082 = vmatprep.subr.bf16.mxu0 0
        %1083 = vmatpush1.bf16.msra.mxu0 0
        %1084 = vmatprep.subr.bf16.mxu0 0
        %1085 = vmatpush1.bf16.msra.mxu0 0
        %1086 = vmatprep.subr.bf16.mxu0 0
        %1087 = vmatpush1.bf16.msra.mxu0 0
        %1088 = vmatprep.subr.bf16.mxu0 0
        %1089 = vmatpush1.bf16.msra.mxu0 0
        %1090 = vmatprep.subr.bf16.mxu0 0
        %1091 = vmatpush1.bf16.msra.mxu0 0
        %1092 = vmatprep.subr.bf16.mxu0 0
        %1093 = vmatpush1.bf16.msra.mxu0 0
        %1094 = vmatprep.subr.bf16.mxu0 0
        %1095 = vmatpush1.bf16.msra.mxu0 0
        %1096 = vmatprep.subr.bf16.mxu0 0
        %1097 = vmatpush1.bf16.msra.mxu0 %v1080
        %1098 = vmatprep.subr.bf16.mxu0 0
        %1099 = vmatpush2.bf16.msra.mxu0 0
        %1100 = vmatprep.subr.bf16.mxu0 0
        %1101 = vmatpush2.bf16.msra.mxu0 0
        %1102 = vmatprep.subr.bf16.mxu0 0
        %1103 = vmatpush2.bf16.msra.mxu0 0
        %1104 = vmatprep.subr.bf16.mxu0 0
        %1105 = vmatpush2.bf16.msra.mxu0 0
        %1106 = vmatprep.subr.bf16.mxu0 0
        %1107 = vmatpush2.bf16.msra.mxu0 0
        %1108 = vmatprep.subr.bf16.mxu0 0
        %1109 = vmatpush2.bf16.msra.mxu0 0
        %1110 = vmatprep.subr.bf16.mxu0 0
        %1111 = vmatpush2.bf16.msra.mxu0 0
        %1112 = vmatprep.subr.bf16.mxu0 0
        %1113 = vmatpush2.bf16.msra.mxu0 0
        %1114 = vmatprep.mubr.bf16.mxu0 0
        %1115 = vmatmul.mubr.bf16.gmra.mxu0 %v1077
        %v1116 = vpop.f32.mrf.mxu0
        %v1117 = vadd.f32 0.0, %v1116
        %v1118 = vpop.f32.mrf.mxu0
        %v1119 = vpop.f32.mrf.mxu0
        %v1120 = vpop.f32.mrf.mxu0
        %1121 = vdwg.mxu0
        %1122 = vrot.lane.b32.xlu0 %v778, 112
        %v1123 = vpop.permute.xlu0 %1122
        %v1125 = vsel %vm783, %v1023, 0
        %v1128 = vsel %vm1030, %v1123, 0
        %1130 = vmatprep.subr.bf16.mxu0 0
        %1131 = vmatpush1.bf16.msra.mxu0 0
        %1132 = vmatprep.subr.bf16.mxu0 0
        %1133 = vmatpush1.bf16.msra.mxu0 0
        %1134 = vmatprep.subr.bf16.mxu0 0
        %1135 = vmatpush1.bf16.msra.mxu0 0
        %1136 = vmatprep.subr.bf16.mxu0 0
        %1137 = vmatpush1.bf16.msra.mxu0 0
        %1138 = vmatprep.subr.bf16.mxu0 0
        %1139 = vmatpush1.bf16.msra.mxu0 0
        %1140 = vmatprep.subr.bf16.mxu0 0
        %1141 = vmatpush1.bf16.msra.mxu0 0
        %1142 = vmatprep.subr.bf16.mxu0 0
        %1143 = vmatpush1.bf16.msra.mxu0 0
        %1144 = vmatprep.subr.bf16.mxu0 0
        %1145 = vmatpush1.bf16.msra.mxu0 %v1128
        %1146 = vmatprep.subr.bf16.mxu0 0
        %1147 = vmatpush2.bf16.msra.mxu0 0
        %1148 = vmatprep.subr.bf16.mxu0 0
        %1149 = vmatpush2.bf16.msra.mxu0 0
        %1150 = vmatprep.subr.bf16.mxu0 0
        %1151 = vmatpush2.bf16.msra.mxu0 0
        %1152 = vmatprep.subr.bf16.mxu0 0
        %1153 = vmatpush2.bf16.msra.mxu0 0
        %1154 = vmatprep.subr.bf16.mxu0 0
        %1155 = vmatpush2.bf16.msra.mxu0 0
        %1156 = vmatprep.subr.bf16.mxu0 0
        %1157 = vmatpush2.bf16.msra.mxu0 0
        %1158 = vmatprep.subr.bf16.mxu0 0
        %1159 = vmatpush2.bf16.msra.mxu0 0
        %1160 = vmatprep.subr.bf16.mxu0 0
        %1161 = vmatpush2.bf16.msra.mxu0 0
        %1162 = vmatprep.mubr.bf16.mxu0 0
        %1163 = vmatmul.mubr.bf16.gmra.mxu0 %v1125
        %v1164 = vpop.f32.mrf.mxu0
        %v1165 = vadd.f32 0.0, %v1164
        %v1166 = vpop.f32.mrf.mxu0
        %v1167 = vpop.f32.mrf.mxu0
        %v1168 = vpop.f32.mrf.mxu0
        %1169 = vdwg.mxu0
        %1170 = vrot.lane.b32.xlu0 %v779, 112
        %v1171 = vpop.permute.xlu0 %1170
        %v1173 = vsel %vm783, %v1024, 0
        %v1176 = vsel %vm1030, %v1171, 0
        %1178 = vmatprep.subr.bf16.mxu0 0
        %1179 = vmatpush1.bf16.msra.mxu0 0
        %1180 = vmatprep.subr.bf16.mxu0 0
        %1181 = vmatpush1.bf16.msra.mxu0 0
        %1182 = vmatprep.subr.bf16.mxu0 0
        %1183 = vmatpush1.bf16.msra.mxu0 0
        %1184 = vmatprep.subr.bf16.mxu0 0
        %1185 = vmatpush1.bf16.msra.mxu0 0
        %1186 = vmatprep.subr.bf16.mxu0 0
        %1187 = vmatpush1.bf16.msra.mxu0 0
        %1188 = vmatprep.subr.bf16.mxu0 0
        %1189 = vmatpush1.bf16.msra.mxu0 0
        %1190 = vmatprep.subr.bf16.mxu0 0
        %1191 = vmatpush1.bf16.msra.mxu0 0
        %1192 = vmatprep.subr.bf16.mxu0 0
        %1193 = vmatpush1.bf16.msra.mxu0 %v1176
        %1194 = vmatprep.subr.bf16.mxu0 0
        %1195 = vmatpush2.bf16.msra.mxu0 0
        %1196 = vmatprep.subr.bf16.mxu0 0
        %1197 = vmatpush2.bf16.msra.mxu0 0
        %1198 = vmatprep.subr.bf16.mxu0 0
        %1199 = vmatpush2.bf16.msra.mxu0 0
        %1200 = vmatprep.subr.bf16.mxu0 0
        %1201 = vmatpush2.bf16.msra.mxu0 0
        %1202 = vmatprep.subr.bf16.mxu0 0
        %1203 = vmatpush2.bf16.msra.mxu0 0
        %1204 = vmatprep.subr.bf16.mxu0 0
        %1205 = vmatpush2.bf16.msra.mxu0 0
        %1206 = vmatprep.subr.bf16.mxu0 0
        %1207 = vmatpush2.bf16.msra.mxu0 0
        %1208 = vmatprep.subr.bf16.mxu0 0
        %1209 = vmatpush2.bf16.msra.mxu0 0
        %1210 = vmatprep.mubr.bf16.mxu0 0
        %1211 = vmatmul.mubr.bf16.gmra.mxu0 %v1173
        %v1212 = vpop.f32.mrf.mxu0
        %v1213 = vadd.f32 0.0, %v1212
        %v1214 = vpop.f32.mrf.mxu0
        %v1215 = vpop.f32.mrf.mxu0
        %v1216 = vpop.f32.mrf.mxu0
        %1217 = vdwg.mxu0
        %1219 = vrot.lane.b32.xlu0 %v1117, 8
        %v1220 = vpop.permute.xlu0 %1219
        %1223 = vrot.lane.b32.xlu0 %v1165, 16
        %v1224 = vpop.permute.xlu0 %1223
        %1227 = vrot.lane.b32.xlu0 %v1213, 24
        %v1228 = vpop.permute.xlu0 %1227
        %v1230 = vsel %vm783, %v1069, %v1220
        %vm1231 = vcmask 130048
        %v1232 = vsel %vm1231, %v1230, %v1224
        %vm1233 = vcmask 195584
        %v1234 = vsel %vm1233, %v1232, %v1228
        %v1235 = vpack.c.bf16 %v1234, %v1234
        %v1236 = vld [vmem:[%s3] sm:$0xf]
        %v1237 = vld [vmem:[%s3 + $0x4] sm:$0xf]
        %v1238 = vld [vmem:[%s3 + $0x8] sm:$0xf]
        %v1239 = vld [vmem:[%s3 + $0xc] sm:$0xf]
        %v1240 = vld [vmem:[#allocation5] sm:$0x1]
        %v1242 = vlaneseq
        %v1243 = vshrl.u32 %v1242, 7
        %v1244 = vsub.s32 0, %v1243
        %v1245 = vrot.slane %v1240, %v1244
        %v1251 = vunpack.c.l.b16 %v1236
        %v1252 = vunpack.c.l.b16 %v1237
        %v1253 = vunpack.c.l.b16 %v1238
        %v1254 = vunpack.c.l.b16 %v1239
        %v1255 = vpack.c.b16 %v1252, %v1251
        %v1256 = vpack.c.b16 %v1254, %v1253
        %v1260 = vsel %vm662, %v1235, 0
        %1262 = vmatprep.subr.bf16.mxu0 0
        %1263 = vmatpush1.bf16.msra.mxu0 0
        %1264 = vmatprep.subr.bf16.mxu0 0
        %1265 = vmatpush1.bf16.msra.mxu0 0
        %1266 = vmatprep.subr.bf16.mxu0 0
        %1267 = vmatpush1.bf16.msra.mxu0 0
        %1268 = vmatprep.subr.bf16.mxu0 0
        %1269 = vmatpush1.bf16.msra.mxu0 0
        %1270 = vmatprep.subr.bf16.mxu0 0
        %1271 = vmatpush1.bf16.msra.mxu0 0
        %1272 = vmatprep.subr.bf16.mxu0 0
        %1273 = vmatpush1.bf16.msra.mxu0 0
        %1274 = vmatprep.subr.bf16.mxu0 0
        %1275 = vmatpush1.bf16.msra.mxu0 %v1256
        %1276 = vmatprep.subr.bf16.mxu0 0
        %1277 = vmatpush1.bf16.msra.mxu0 %v1255
        %1278 = vmatprep.subr.bf16.mxu0 0
        %1279 = vmatpush2.bf16.msra.mxu0 0
        %1280 = vmatprep.subr.bf16.mxu0 0
        %1281 = vmatpush2.bf16.msra.mxu0 0
        %1282 = vmatprep.subr.bf16.mxu0 0
        %1283 = vmatpush2.bf16.msra.mxu0 0
        %1284 = vmatprep.subr.bf16.mxu0 0
        %1285 = vmatpush2.bf16.msra.mxu0 0
        %1286 = vmatprep.subr.bf16.mxu0 0
        %1287 = vmatpush2.bf16.msra.mxu0 0
        %1288 = vmatprep.subr.bf16.mxu0 0
        %1289 = vmatpush2.bf16.msra.mxu0 0
        %1290 = vmatprep.subr.bf16.mxu0 0
        %1291 = vmatpush2.bf16.msra.mxu0 0
        %1292 = vmatprep.subr.bf16.mxu0 0
        %1293 = vmatpush2.bf16.msra.mxu0 0
        %1294 = vmatprep.mubr.bf16.mxu0 0
        %1295 = vmatmul.mubr.bf16.gmra.mxu0 %v1260
        %v1296 = vpop.f32.mrf.mxu0
        %v1297 = vadd.f32 %v1245, %v1296
        %v1298 = vpop.f32.mrf.mxu0
        %v1299 = vpop.f32.mrf.mxu0
        %v1300 = vpop.f32.mrf.mxu0
        %1301 = vdwg.mxu0
        %v1302 = vadd.f32 %v659, %v1297
        %v1303 = vld [vmem:[#allocation10] sm:$0x1]
        %v1304 = vld [vmem:[#allocation11] sm:$0x1]
        %v1305 = vsel %vm662, %v1302, 0.0
        %1306 = vadd.xlane.f32.xlu0 %v1305
        %v1307 = vpop.xlane.xlu0 %1306
        %v1308 = vmul.f32 %v1307, %v666
        %v1309 = vsub.f32 %v1302, %v1308
        %v1310 = vmul.f32 %v1309, %v1309
        %v1311 = vsel %vm662, %v1310, 0.0
        %1312 = vadd.xlane.f32.xlu0 %v1311
        %v1313 = vpop.xlane.xlu0 %1312
        %v1314 = vmul.f32 %v1313, %v666
        %v1315 = vadd.f32 %v1314, 1e-05
        %v1316 = vrsqrt.pop %v1315
        %v1317 = vmul.f32 %v1309, %v1316
        %v1319 = vlaneseq
        %v1320 = vshrl.u32 %v1319, 7
        %v1321 = vsub.s32 0, %v1320
        %v1322 = vrot.slane %v1303, %v1321
        %v1324 = vmul.f32 %v1317, %v1322
        %v1326 = vlaneseq
        %v1327 = vshrl.u32 %v1326, 7
        %v1328 = vsub.s32 0, %v1327
        %v1329 = vrot.slane %v1304, %v1328
        %v1331 = vadd.f32 %v1324, %v1329
        %v1332 = vpack.c.bf16 %v1331, %v1331
        %v1333 = vld [vmem:[%s9] sm:$0xf]
        %v1334 = vld [vmem:[%s9 + $0x4] sm:$0xf]
        %v1335 = vld [vmem:[%s9 + $0x8] sm:$0xf]
        %v1336 = vld [vmem:[%s9 + $0xc] sm:$0xf]
        %v1337 = vld [vmem:[%s10] sm:$0x1]
        %v1339 = vlaneseq
        %v1340 = vshrl.u32 %v1339, 7
        %v1341 = vsub.s32 0, %v1340
        %v1342 = vrot.slane %v1337, %v1341
        %v1348 = vunpack.c.l.b16 %v1333
        %v1349 = vunpack.c.l.b16 %v1334
        %v1350 = vunpack.c.l.b16 %v1335
        %v1351 = vunpack.c.l.b16 %v1336
        %v1352 = vpack.c.b16 %v1349, %v1348
        %v1353 = vpack.c.b16 %v1351, %v1350
        %v1357 = vsel %vm662, %v1332, 0
        %1359 = vmatprep.subr.bf16.mxu0 0
        %1360 = vmatpush1.bf16.msra.mxu0 0
        %1361 = vmatprep.subr.bf16.mxu0 0
        %1362 = vmatpush1.bf16.msra.mxu0 0
        %1363 = vmatprep.subr.bf16.mxu0 0
        %1364 = vmatpush1.bf16.msra.mxu0 0
        %1365 = vmatprep.subr.bf16.mxu0 0
        %1366 = vmatpush1.bf16.msra.mxu0 0
        %1367 = vmatprep.subr.bf16.mxu0 0
        %1368 = vmatpush1.bf16.msra.mxu0 0
        %1369 = vmatprep.subr.bf16.mxu0 0
        %1370 = vmatpush1.bf16.msra.mxu0 0
        %1371 = vmatprep.subr.bf16.mxu0 0
        %1372 = vmatpush1.bf16.msra.mxu0 %v1353
        %1373 = vmatprep.subr.bf16.mxu0 0
        %1374 = vmatpush1.bf16.msra.mxu0 %v1352
        %1375 = vmatprep.subr.bf16.mxu0 0
        %1376 = vmatpush2.bf16.msra.mxu0 0
        %1377 = vmatprep.subr.bf16.mxu0 0
        %1378 = vmatpush2.bf16.msra.mxu0 0
        %1379 = vmatprep.subr.bf16.mxu0 0
        %1380 = vmatpush2.bf16.msra.mxu0 0
        %1381 = vmatprep.subr.bf16.mxu0 0
        %1382 = vmatpush2.bf16.msra.mxu0 0
        %1383 = vmatprep.subr.bf16.mxu0 0
        %1384 = vmatpush2.bf16.msra.mxu0 0
        %1385 = vmatprep.subr.bf16.mxu0 0
        %1386 = vmatpush2.bf16.msra.mxu0 0
        %1387 = vmatprep.subr.bf16.mxu0 0
        %1388 = vmatpush2.bf16.msra.mxu0 0
        %1389 = vmatprep.subr.bf16.mxu0 0
        %1390 = vmatpush2.bf16.msra.mxu0 0
        %1391 = vmatprep.mubr.bf16.mxu0 0
        %1392 = vmatmul.mubr.bf16.gmra.mxu0 %v1357
        %v1393 = vpop.f32.mrf.mxu0
        %v1394 = vadd.f32 %v1342, %v1393
        %v1395 = vpop.f32.mrf.mxu0
        %v1396 = vpop.f32.mrf.mxu0
        %v1397 = vpop.f32.mrf.mxu0
        %1398 = vdwg.mxu0
        %v1399 = vmax.f32 %v1394, 0.0
        %v1400 = vpack.c.bf16 %v1399, %v1399
        %v1401 = vld [vmem:[%s11] sm:$0xf]
        %v1402 = vld [vmem:[%s11 + $0x4] sm:$0xf]
        %v1403 = vld [vmem:[%s11 + $0x8] sm:$0xf]
        %v1404 = vld [vmem:[%s11 + $0xc] sm:$0xf]
        %v1405 = vld [vmem:[%s11 + $0x10] sm:$0xf]
        %v1406 = vld [vmem:[%s11 + $0x14] sm:$0xf]
        %v1407 = vld [vmem:[%s11 + $0x18] sm:$0xf]
        %v1408 = vld [vmem:[%s11 + $0x1c] sm:$0xf]
        %v1409 = vld [vmem:[%s11 + $0x20] sm:$0xf]
        %v1410 = vld [vmem:[%s11 + $0x24] sm:$0xf]
        %v1411 = vld [vmem:[%s11 + $0x28] sm:$0xf]
        %v1412 = vld [vmem:[%s11 + $0x2c] sm:$0xf]
        %v1413 = vld [vmem:[%s11 + $0x30] sm:$0xf]
        %v1414 = vld [vmem:[%s11 + $0x34] sm:$0xf]
        %v1415 = vld [vmem:[%s11 + $0x38] sm:$0xf]
        %v1416 = vld [vmem:[%s11 + $0x3c] sm:$0xf]
        %v1417 = vld [vmem:[%s12] sm:$0x1]
        %v1419 = vlaneseq
        %v1420 = vshrl.u32 %v1419, 7
        %v1421 = vsub.s32 0, %v1420
        %v1422 = vrot.slane %v1417, %v1421
        %v1440 = vunpack.c.l.b16 %v1401
        %v1441 = vunpack.c.l.b16 %v1402
        %v1442 = vunpack.c.l.b16 %v1403
        %v1443 = vunpack.c.l.b16 %v1404
        %v1444 = vunpack.c.l.b16 %v1405
        %v1445 = vunpack.c.l.b16 %v1406
        %v1446 = vunpack.c.l.b16 %v1407
        %v1447 = vunpack.c.l.b16 %v1408
        %v1448 = vunpack.c.l.b16 %v1409
        %v1449 = vunpack.c.l.b16 %v1410
        %v1450 = vunpack.c.l.b16 %v1411
        %v1451 = vunpack.c.l.b16 %v1412
        %v1452 = vunpack.c.l.b16 %v1413
        %v1453 = vunpack.c.l.b16 %v1414
        %v1454 = vunpack.c.l.b16 %v1415
        %v1455 = vunpack.c.l.b16 %v1416
        %v1456 = vpack.c.b16 %v1441, %v1440
        %v1457 = vpack.c.b16 %v1443, %v1442
        %v1458 = vpack.c.b16 %v1445, %v1444
        %v1459 = vpack.c.b16 %v1447, %v1446
        %v1460 = vpack.c.b16 %v1449, %v1448
        %v1461 = vpack.c.b16 %v1451, %v1450
        %v1462 = vpack.c.b16 %v1453, %v1452
        %v1463 = vpack.c.b16 %v1455, %v1454
        %1472 = vmatprep.subr.bf16.mxu0 0
        %1473 = vmatpush1.bf16.msra.mxu0 %v1463
        %1474 = vmatprep.subr.bf16.mxu0 0
        %1475 = vmatpush1.bf16.msra.mxu0 %v1462
        %1476 = vmatprep.subr.bf16.mxu0 0
        %1477 = vmatpush1.bf16.msra.mxu0 %v1461
        %1478 = vmatprep.subr.bf16.mxu0 0
        %1479 = vmatpush1.bf16.msra.mxu0 %v1460
        %1480 = vmatprep.subr.bf16.mxu0 0
        %1481 = vmatpush1.bf16.msra.mxu0 %v1459
        %1482 = vmatprep.subr.bf16.mxu0 0
        %1483 = vmatpush1.bf16.msra.mxu0 %v1458
        %1484 = vmatprep.subr.bf16.mxu0 0
        %1485 = vmatpush1.bf16.msra.mxu0 %v1457
        %1486 = vmatprep.subr.bf16.mxu0 0
        %1487 = vmatpush1.bf16.msra.mxu0 %v1456
        %1488 = vmatprep.subr.bf16.mxu0 0
        %1489 = vmatpush2.bf16.msra.mxu0 0
        %1490 = vmatprep.subr.bf16.mxu0 0
        %1491 = vmatpush2.bf16.msra.mxu0 0
        %1492 = vmatprep.subr.bf16.mxu0 0
        %1493 = vmatpush2.bf16.msra.mxu0 0
        %1494 = vmatprep.subr.bf16.mxu0 0
        %1495 = vmatpush2.bf16.msra.mxu0 0
        %1496 = vmatprep.subr.bf16.mxu0 0
        %1497 = vmatpush2.bf16.msra.mxu0 0
        %1498 = vmatprep.subr.bf16.mxu0 0
        %1499 = vmatpush2.bf16.msra.mxu0 0
        %1500 = vmatprep.subr.bf16.mxu0 0
        %1501 = vmatpush2.bf16.msra.mxu0 0
        %1502 = vmatprep.subr.bf16.mxu0 0
        %1503 = vmatpush2.bf16.msra.mxu0 0
        %1504 = vmatprep.mubr.bf16.mxu0 0
        %1505 = vmatmul.mubr.bf16.gmra.mxu0 %v1400
        %v1506 = vpop.f32.mrf.mxu0
        %v1507 = vadd.f32 %v1422, %v1506
        %v1508 = vpop.f32.mrf.mxu0
        %v1509 = vpop.f32.mrf.mxu0
        %v1510 = vpop.f32.mrf.mxu0
        %1511 = vdwg.mxu0
        %v1512 = vadd.f32 %v1302, %v1507
        %1513 = vst.msk [vmem:[%s646] sm:$0xff] %vm662, %v1512
        %v1514 = vpack.c.bf16 %v1512, %v1512
        %v1515 = vld [vmem:[%s13] sm:$0xf]
        %v1516 = vld [vmem:[%s13 + $0x4] sm:$0xf]
        %v1517 = vld [vmem:[%s13 + $0x8] sm:$0xf]
        %v1518 = vld [vmem:[%s13 + $0xc] sm:$0xf]
        %v1519 = vld [vmem:[%s14] sm:$0x1]
        %v1521 = vlaneseq
        %v1522 = vshrl.u32 %v1521, 7
        %v1523 = vsub.s32 0, %v1522
        %v1524 = vrot.slane %v1519, %v1523
        %v1530 = vunpack.c.l.b16 %v1515
        %v1531 = vunpack.c.l.b16 %v1516
        %v1532 = vunpack.c.l.b16 %v1517
        %v1533 = vunpack.c.l.b16 %v1518
        %v1534 = vpack.c.b16 %v1531, %v1530
        %v1535 = vpack.c.b16 %v1533, %v1532
        %v1539 = vsel %vm662, %v1514, 0
        %1541 = vmatprep.subr.bf16.mxu0 0
        %1542 = vmatpush1.bf16.msra.mxu0 0
        %1543 = vmatprep.subr.bf16.mxu0 0
        %1544 = vmatpush1.bf16.msra.mxu0 0
        %1545 = vmatprep.subr.bf16.mxu0 0
        %1546 = vmatpush1.bf16.msra.mxu0 0
        %1547 = vmatprep.subr.bf16.mxu0 0
        %1548 = vmatpush1.bf16.msra.mxu0 0
        %1549 = vmatprep.subr.bf16.mxu0 0
        %1550 = vmatpush1.bf16.msra.mxu0 0
        %1551 = vmatprep.subr.bf16.mxu0 0
        %1552 = vmatpush1.bf16.msra.mxu0 0
        %1553 = vmatprep.subr.bf16.mxu0 0
        %1554 = vmatpush1.bf16.msra.mxu0 %v1535
        %1555 = vmatprep.subr.bf16.mxu0 0
        %1556 = vmatpush1.bf16.msra.mxu0 %v1534
        %1557 = vmatprep.subr.bf16.mxu0 0
        %1558 = vmatpush2.bf16.msra.mxu0 0
        %1559 = vmatprep.subr.bf16.mxu0 0
        %1560 = vmatpush2.bf16.msra.mxu0 0
        %1561 = vmatprep.subr.bf16.mxu0 0
        %1562 = vmatpush2.bf16.msra.mxu0 0
        %1563 = vmatprep.subr.bf16.mxu0 0
        %1564 = vmatpush2.bf16.msra.mxu0 0
        %1565 = vmatprep.subr.bf16.mxu0 0
        %1566 = vmatpush2.bf16.msra.mxu0 0
        %1567 = vmatprep.subr.bf16.mxu0 0
        %1568 = vmatpush2.bf16.msra.mxu0 0
        %1569 = vmatprep.subr.bf16.mxu0 0
        %1570 = vmatpush2.bf16.msra.mxu0 0
        %1571 = vmatprep.subr.bf16.mxu0 0
        %1572 = vmatpush2.bf16.msra.mxu0 0
        %1573 = vmatprep.mubr.bf16.mxu0 0
        %1574 = vmatmul.mubr.bf16.gmra.mxu0 %v1539
        %v1575 = vpop.f32.mrf.mxu0
        %v1576 = vadd.f32 %v1524, %v1575
        %v1577 = vpop.f32.mrf.mxu0
        %v1578 = vpop.f32.mrf.mxu0
        %v1579 = vpop.f32.mrf.mxu0
        %1580 = vdwg.mxu0
        %v1581 = vmax.f32 %v1576, 0.0
        %v1582 = vpack.c.bf16 %v1581, %v1581
        %v1583 = vld [vmem:[%s15] sm:$0xf]
        %v1584 = vld [vmem:[%s15 + $0x4] sm:$0xf]
        %v1585 = vld [vmem:[%s15 + $0x8] sm:$0xf]
        %v1586 = vld [vmem:[%s15 + $0xc] sm:$0xf]
        %v1587 = vld [vmem:[%s16] sm:$0x1]
        %v1589 = vlaneseq
        %v1590 = vshrl.u32 %v1589, 7
        %v1591 = vsub.s32 0, %v1590
        %v1592 = vrot.slane %v1587, %v1591
        %v1598 = vunpack.c.l.b16 %v1583
        %v1599 = vunpack.c.l.b16 %v1584
        %v1600 = vunpack.c.l.b16 %v1585
        %v1601 = vunpack.c.l.b16 %v1586
        %v1602 = vpack.c.b16 %v1599, %v1598
        %v1603 = vpack.c.b16 %v1601, %v1600
        %v1607 = vsel %vm662, %v1582, 0
        %1609 = vmatprep.subr.bf16.mxu0 0
        %1610 = vmatpush1.bf16.msra.mxu0 0
        %1611 = vmatprep.subr.bf16.mxu0 0
        %1612 = vmatpush1.bf16.msra.mxu0 0
        %1613 = vmatprep.subr.bf16.mxu0 0
        %1614 = vmatpush1.bf16.msra.mxu0 0
        %1615 = vmatprep.subr.bf16.mxu0 0
        %1616 = vmatpush1.bf16.msra.mxu0 0
        %1617 = vmatprep.subr.bf16.mxu0 0
        %1618 = vmatpush1.bf16.msra.mxu0 0
        %1619 = vmatprep.subr.bf16.mxu0 0
        %1620 = vmatpush1.bf16.msra.mxu0 0
        %1621 = vmatprep.subr.bf16.mxu0 0
        %1622 = vmatpush1.bf16.msra.mxu0 %v1603
        %1623 = vmatprep.subr.bf16.mxu0 0
        %1624 = vmatpush1.bf16.msra.mxu0 %v1602
        %1625 = vmatprep.subr.bf16.mxu0 0
        %1626 = vmatpush2.bf16.msra.mxu0 0
        %1627 = vmatprep.subr.bf16.mxu0 0
        %1628 = vmatpush2.bf16.msra.mxu0 0
        %1629 = vmatprep.subr.bf16.mxu0 0
        %1630 = vmatpush2.bf16.msra.mxu0 0
        %1631 = vmatprep.subr.bf16.mxu0 0
        %1632 = vmatpush2.bf16.msra.mxu0 0
        %1633 = vmatprep.subr.bf16.mxu0 0
        %1634 = vmatpush2.bf16.msra.mxu0 0
        %1635 = vmatprep.subr.bf16.mxu0 0
        %1636 = vmatpush2.bf16.msra.mxu0 0
        %1637 = vmatprep.subr.bf16.mxu0 0
        %1638 = vmatpush2.bf16.msra.mxu0 0
        %1639 = vmatprep.subr.bf16.mxu0 0
        %1640 = vmatpush2.bf16.msra.mxu0 0
        %1641 = vmatprep.mubr.bf16.mxu0 0
        %1642 = vmatmul.mubr.bf16.gmra.mxu0 %v1607
        %v1643 = vpop.f32.mrf.mxu0
        %v1644 = vadd.f32 %v1592, %v1643
        %v1645 = vpop.f32.mrf.mxu0
        %v1646 = vpop.f32.mrf.mxu0
        %v1647 = vpop.f32.mrf.mxu0
        %1648 = vdwg.mxu0
        %1649 = vst [vmem:[%s653] sm:$0xff] %v1644
        %s1650 = sand.u32 %s410, 1
        %s1651 = scalar_lea.sflag [#allocation4], %s1650
        %s1652 = sand.u32 %s410, 1
        %s1653 = smul.addr %s1652, 8
        %s1654 = scalar_lea.vmem [#allocation13], %s1653
        %s1655 = sand.u32 %s436, 1
        %s1656 = scalar_lea.sflag [#allocation15], %s1655
        %s1657 = sand.u32 %s436, 1
        %s1658 = smul.addr %s1657, 8
        %s1659 = scalar_lea.vmem [#allocation14], %s1658
        // Predicated region
        $region113: #{tpu_custom_call.1} parent=87 // pred_check
          %p1660 = pneg %p420
        $region114: #{tpu_custom_call.1} parent=87 // pred_check_branch
          %1662 = sbr.rel (%p1660) target = $region116
        $region115: #{tpu_custom_call.1} parent=87 // pred_region
          %s1664 = ssub.s32 128, 128
          %1665 = vsyncadd %s1651, %s1664
          %s1666 = smul.addr %s40, 128
          %s1667 = scalar_lea.hbm %s17, %s1666
          %s1669 = sshll.u32 %s1654, 4
          %s1670 = int_to_ptr.vmem [resolvable:$true] %s1669
          %1672 = dma.vmem_to_hbm [thread:$0]  %s1670, 128, %s1667, %s1651
        $region116: #{tpu_custom_call.1} parent=87 // pred_fallthru
          _
        // Predicated region
        $region117: #{tpu_custom_call.1} parent=87 // pred_check
          %p1673 = pneg %p446
        $region118: #{tpu_custom_call.1} parent=87 // pred_check_branch
          %1675 = sbr.rel (%p1673) target = $region120
        $region119: #{tpu_custom_call.1} parent=87 // pred_region
          %s1677 = ssub.s32 128, 128
          %1678 = vsyncadd %s1656, %s1677
          %s1679 = smul.addr %s40, 128
          %s1680 = scalar_lea.hbm %s18, %s1679
          %s1682 = sshll.u32 %s1659, 4
          %s1683 = int_to_ptr.vmem [resolvable:$true] %s1682
          %1685 = dma.vmem_to_hbm [thread:$0]  %s1683, 128, %s1680, %s1656
        $region120: #{tpu_custom_call.1} parent=87 // pred_fallthru
          _
      $region88: #{tpu_custom_call.1} parent=5 // pred_fallthru
        _
      %p1686 = scmp.le.s32.totalorder 2, %s35
      // Predicated region
      $region121: #{tpu_custom_call.1} parent=5 // pred_check
        %p1687 = pneg %p1686
      $region122: #{tpu_custom_call.1} parent=5 // pred_check_branch
        %1689 = sbr.rel (%p1687) target = $region124
      $region123: #{tpu_custom_call.1} parent=5 // pred_region
        %s1690 = ssub.s32 %s35, 2
        // Predicated region
        $region125: #{tpu_custom_call.1} parent=123 // pred_check
          %p1691 = pneg %p426
        $region126: #{tpu_custom_call.1} parent=123 // pred_check_branch
          %1693 = sbr.rel (%p1691) target = $region128
        $region127: #{tpu_custom_call.1} parent=123 // pred_region
          %s1694 = sand.u32 %s411, 1
          %s1695 = scalar_lea.sflag [#allocation4], %s1694
          %s1696 = sand.u32 %s411, 1
          %s1697 = smul.addr %s1696, 8
          %s1698 = scalar_lea.vmem [#allocation13], %s1697
          %1699 = dma.done %s1695, 128
        $region128: #{tpu_custom_call.1} parent=123 // pred_fallthru
          _
        // Predicated region
        $region129: #{tpu_custom_call.1} parent=123 // pred_check
          %p1700 = pneg %p452
        $region130: #{tpu_custom_call.1} parent=123 // pred_check_branch
          %1702 = sbr.rel (%p1700) target = $region132
        $region131: #{tpu_custom_call.1} parent=123 // pred_region
          %s1703 = sand.u32 %s437, 1
          %s1704 = scalar_lea.sflag [#allocation15], %s1703
          %s1705 = sand.u32 %s437, 1
          %s1706 = smul.addr %s1705, 8
          %s1707 = scalar_lea.vmem [#allocation14], %s1706
          %1708 = dma.done %s1704, 128
        $region132: #{tpu_custom_call.1} parent=123 // pred_fallthru
          _
      $region124: #{tpu_custom_call.1} parent=5 // pred_fallthru
        _
    $region6: #{tpu_custom_call.1} parent=1 // loop_footer
      %s39 = sadd.s32 1, %s35
    $region7: #{tpu_custom_call.1} parent=1 // loop_footer_branch
      %34 = sbr.rel target = $region3
    $region8: #{tpu_custom_call.1} parent=1 // loop_exit
      _
    %1709 = vsyncpa [#allocation3], 1
    %s1710 = scalar_lea.sflag [#allocation3], 1
    %1711 = vsyncpa %s1710, 1
    %1712 = vsyncpa [#allocation6], 1
    %1713 = vsyncpa [#allocation9], 1
    %1714 = vsyncpa [#allocation12], 1
    %1715 = vsyncpa [#allocation4], 1
    %s1716 = scalar_lea.sflag [#allocation4], 1
    %1717 = vsyncpa %s1716, 1
    %1718 = vsyncpa [#allocation15], 1
    %s1719 = scalar_lea.sflag [#allocation15], 1
    %1720 = vsyncpa %s1719, 1

</llo_original>
